<compile_context>
chip_gen: v6e
topology: v6e:2x2x1
jax: 0.10.0
libtpu: 0.0.40
codegen_flags: <defaults>
</compile_context>

<pallas_src>
import functools

import jax
import jax.numpy as jnp
from jax import lax
from jax.experimental import pallas as pl
from jax.experimental.pallas import tpu as pltpu

BN_EPS = 1e-5
LEAKY_SLOPE = 0.1


def _round_up(x, m):
    return (x + m - 1) // m * m


def _tpu_budgets():
    """Generation-aware VMEM budget and Cout tile preference.

    v5e / v6e have 128 MiB of physical VMEM per TensorCore, v7x has 64 MiB.
    v5e's MXU is 4x(128x128), so 128-wide Cout tiles keep it best fed.
    """
    kind = ""
    try:
        kind = jax.devices()[0].device_kind.lower()
    except Exception:  # defensive: never fail host-side setup
        pass
    phys = 64 * 1024 * 1024 if "7" in kind else 128 * 1024 * 1024
    try:
        phys = int(getattr(pltpu.get_tpu_info(), "vmem_capacity_bytes", phys))
    except Exception:  # defensive
        pass
    vmem_limit = min(phys * 3 // 4, 96 * 1024 * 1024)        # 48 MiB on v7x
    tile_cap = (4 if phys <= 80 * 1024 * 1024 else 8) * 1024 * 1024
    prefer_tcout = 128 if "v5" in kind else 256
    return vmem_limit, tile_cap, prefer_tcout


def _pick_row_tile(ho, wo, tcout, cap_bytes):
    """Largest TH dividing Ho with TH*Wo a multiple of 128 (lane-dense stores of
    the channels-major output block) and a <= cap f32 working tile."""
    best = None
    for t in range(1, ho + 1):
        if ho % t:
            continue
        if (t * wo) % 128 != 0 and t != ho:
            continue
        if t * wo * tcout * 4 <= cap_bytes:
            best = t
    if best is None:
        # TODO(synk): with no friendly divisor the whole-height tile may exceed
        #             the per-tile budget on v7x; halo tiling would remove this.
        best = ho
    return best


def _pick_seq_tile(hw, tcout, cap_bytes):
    """Largest spatial tile dividing Ho*Wo, multiple of 128 (or full), <= cap."""
    best = None
    for t in range(1, hw + 1):
        if hw % t:
            continue
        if t % 128 != 0 and t != hw:
            continue
        if t * tcout * 4 <= cap_bytes:
            best = t
    return best if best is not None else hw


def _im2col_patch(x_ref, *, th, wo, kh_total, kw_total):
    """(TH*Wo, KH*KW*Cin) im2col patch for the current row tile (bf16)."""
    cin = x_ref.shape[-1]
    r = pl.program_id(2)
    row0 = pl.multiple_of(r * th, th)
    slab = x_ref[pl.ds(row0, th + kh_total - 1), :, :]        # (TH+KH-1, Wp, Cin)
    taps = [slab[kh:kh + th, kw:kw + wo, :]                   # (TH, Wo, Cin)
            for kh in range(kh_total) for kw in range(kw_total)]
    patch = jnp.concatenate(taps, axis=-1)                    # (TH, Wo, KH*KW*Cin)
    return patch.reshape(th * wo, kh_total * kw_total * cin)


def _conv_stats_kernel(x_ref, w_ref, y_ref, ssum_ref, ssq_ref, *, th, wo, kh, kw):
    """One fused-K conv matmul per (n, cout-tile, row-tile) block + BN partials.

    x_ref   : (Hp, Wp, Cin) bf16    whole padded image for this batch element
    w_ref   : (TCout, KH*KW*Cin)    bf16 weights (resident across row tiles)
    y_ref   : (TCout, TH*Wo)        channels-major conv tile, stored bf16
    ssum_ref: (TCout, 1) f32        per-tile sum
    ssq_ref : (TCout, 1) f32        per-tile sum of squares
    """
    patch = _im2col_patch(x_ref, th=th, wo=wo, kh_total=kh, kw_total=kw)
    acc = lax.dot_general(w_ref[...], patch, (((1,), (1,)), ((), ())),
                          preferred_element_type=jnp.float32)  # (TCout, TH*Wo)
    ssum_ref[...] = jnp.sum(acc, axis=1, keepdims=True)
    ssq_ref[...] = jnp.sum(acc * acc, axis=1, keepdims=True)
    y_ref[...] = acc.astype(y_ref.dtype)


def _conv_bias_kernel(x_ref, w_ref, b_ref, o_ref, *, th, wo, kh, kw):
    """Conv tile + bias (bn_act=False path), stored channels-major directly."""
    patch = _im2col_patch(x_ref, th=th, wo=wo, kh_total=kh, kw_total=kw)
    acc = lax.dot_general(w_ref[...], patch, (((1,), (1,)), ((), ())),
                          preferred_element_type=jnp.float32)  # (TCout, TH*Wo)
    o_ref[...] = (acc + b_ref[...]).astype(o_ref.dtype)


def _bn_leaky_kernel(y_ref, scale_ref, shift_ref, o_ref):
    """Affine BatchNorm + LeakyReLU(0.1) on a large channels-major block."""
    z = y_ref[...].astype(jnp.float32) * scale_ref[...] + shift_ref[...]
    o_ref[...] = jnp.maximum(z, LEAKY_SLOPE * z).astype(o_ref.dtype)


def cnn_block(x_nchw, weight_oihw, *, gamma=None, beta=None, bias=None,
              bn_act=True, padding=1, compute_dtype=jnp.bfloat16):
    """Forward pass of CNNBlock.  Inputs NCHW / OIHW (PyTorch convention)."""
    N, Cin, H, W = x_nchw.shape
    Cout, Cin_w, KH, KW = weight_oihw.shape
    assert Cin == Cin_w
    Ho = H + 2 * padding - (KH - 1)
    Wo = W + 2 * padding - (KW - 1)
    HW = Ho * Wo
    K9 = KH * KW * Cin
    out_dtype = x_nchw.dtype

    vmem_limit, tile_cap, prefer_tcout = _tpu_budgets()

    # Lane-dense channel padding + Cout tile width.
    Cout_p = _round_up(Cout, 128)
    TCout = prefer_tcout if Cout_p % prefer_tcout == 0 else 128
    C = Cout_p // TCout

    # Layout glue (XLA, fuses into a single copy each): NCHW->NHWC + bf16 +
    # spatial zero-pad for the activation; OIHW -> (Cout_p, KH*KW*Cin) for the
    # weights so the in-kernel matmul is one "NT" contraction over K=KH*KW*Cin.
    x_nhwc = jnp.transpose(x_nchw, (0, 2, 3, 1)).astype(compute_dtype)
    xp = jnp.pad(x_nhwc, ((0, 0), (padding, padding), (padding, padding), (0, 0)))
    Hp, Wp = H + 2 * padding, W + 2 * padding
    w2d = jnp.transpose(weight_oihw, (0, 2, 3, 1)).astype(compute_dtype)
    w2d = w2d.reshape(Cout, K9)
    w2d = jnp.pad(w2d, ((0, Cout_p - Cout), (0, 0)))          # (Cout_p, K9)

    # Pass-1 row tile: budget VMEM for the resident image / weight blocks first.
    x_resident = 2 * Hp * Wp * Cin * 2                        # dbl-buffered bf16
    w_resident = 2 * TCout * K9 * 2
    p1_cap = max(min(tile_cap, (vmem_limit - x_resident - w_resident) // 6),
                 128 * 1024)
    TH = _pick_row_tile(Ho, Wo, TCout, p1_cap)
    R = Ho // TH

    grid1 = (N, C, R)                  # row axis innermost: weights stay resident
    cparams = pltpu.CompilerParams(
        dimension_semantics=("parallel", "parallel", "parallel"),
        vmem_limit_bytes=vmem_limit)

    x_spec = pl.BlockSpec((None, Hp, Wp, Cin), lambda n, c, r: (n, 0, 0, 0))
    w_spec = pl.BlockSpec((TCout, K9), lambda n, c, r: (c, 0))
    y_spec = pl.BlockSpec((None, TCout, TH * Wo), lambda n, c, r: (n, c, r))
    col_spec1 = pl.BlockSpec((TCout, 1), lambda n, c, r: (c, 0))

    if bn_act:
        s_spec = pl.BlockSpec((None, None, TCout, 1), lambda n, c, r: (n, r, c, 0))
        y3d, psum, psumsq = pl.pallas_call(
            functools.partial(_conv_stats_kernel, th=TH, wo=Wo, kh=KH, kw=KW),
            grid=grid1,
            in_specs=[x_spec, w_spec],
            out_specs=(y_spec, s_spec, s_spec),
            out_shape=(jax.ShapeDtypeStruct((N, Cout_p, HW), compute_dtype),
                       jax.ShapeDtypeStruct((N, R, Cout_p, 1), jnp.float32),
                       jax.ShapeDtypeStruct((N, R, Cout_p, 1), jnp.float32)),
            compiler_params=cparams,
        )(xp, w2d)

        # Batch statistics from the per-tile partials.
        # NOTE: single-pass E[x^2]-E[x]^2 in f32 (clamped at 0); a Welford /
        # two-pass reduction would track PyTorch more tightly for very large
        # activations.  Padded Cout channels carry sum=sumsq=0 -> var=0, and
        # gamma/beta are zero-padded, so scale=shift=0 there (rsqrt(var+eps)
        # stays finite) -- keep the zero-padding invariant if editing this.
        count = float(N * HW)
        sums = jnp.sum(psum[..., 0], axis=(0, 1))
        sumsq = jnp.sum(psumsq[..., 0], axis=(0, 1))
        mean = sums / count
        var = jnp.maximum(sumsq / count - mean * mean, 0.0)
        gamma_p = jnp.pad(gamma.astype(jnp.float32), (0, Cout_p - Cout))
        beta_p = jnp.pad(beta.astype(jnp.float32), (0, Cout_p - Cout))
        inv_std = lax.rsqrt(var + BN_EPS)
        scale = (gamma_p * inv_std).reshape(Cout_p, 1)
        shift = (beta_p - mean * gamma_p * inv_std).reshape(Cout_p, 1)

        # Pass 2: HBM-bound epilogue on large lane-dense channels-major blocks.
        TP = _pick_seq_tile(HW, TCout, tile_cap)
        P = HW // TP
        grid2 = (N, C, P)
        y_in_spec = pl.BlockSpec((None, TCout, TP), lambda n, c, p: (n, c, p))
        col_spec2 = pl.BlockSpec((TCout, 1), lambda n, c, p: (c, 0))
        out3d = pl.pallas_call(
            _bn_leaky_kernel,
            grid=grid2,
            in_specs=[y_in_spec, col_spec2, col_spec2],
            out_specs=y_in_spec,
            out_shape=jax.ShapeDtypeStruct((N, Cout_p, HW), out_dtype),
            compiler_params=cparams,
        )(y3d, scale, shift)
    else:
        bias_p = jnp.pad(bias.astype(jnp.float32),
                         (0, Cout_p - Cout)).reshape(Cout_p, 1)
        out3d = pl.pallas_call(
            functools.partial(_conv_bias_kernel, th=TH, wo=Wo, kh=KH, kw=KW),
            grid=grid1,
            in_specs=[x_spec, w_spec, col_spec1],
            out_specs=y_spec,
            out_shape=jax.ShapeDtypeStruct((N, Cout_p, HW), out_dtype),
            compiler_params=cparams,
        )(xp, w2d, bias_p)

    # Channels-major output is already NCHW-flattened: slice + reshape only
    # (no full-activation transpose on the output side).
    return out3d[:, :Cout, :].reshape(N, Cout, Ho, Wo)


def _reference(x, w, gamma, beta, bn_act=True, bias=None, padding=1):
    """Pure-JAX reference; conv operands cast to bf16 like the kernel (f32 acc)."""
    y = lax.conv_general_dilated(
        x.astype(jnp.bfloat16), w.astype(jnp.bfloat16),
        window_strides=(1, 1), padding=[(padding, padding)] * 2,
        dimension_numbers=("NCHW", "OIHW", "NCHW"),
        preferred_element_type=jnp.float32)
    if not bn_act:
        return (y + bias.reshape(1, -1, 1, 1)).astype(x.dtype)
    mean = jnp.mean(y, axis=(0, 2, 3), keepdims=True)
    var = jnp.mean((y - mean) ** 2, axis=(0, 2, 3), keepdims=True)
    yn = (y - mean) * lax.rsqrt(var + BN_EPS)
    yn = yn * gamma.reshape(1, -1, 1, 1) + beta.reshape(1, -1, 1, 1)
    return jnp.maximum(yn, LEAKY_SLOPE * yn).astype(x.dtype)


if __name__ == "__main__":
    key = jax.random.PRNGKey(0)
    k_x, k_w, k_b = jax.random.split(key, 3)

    N, Cin, Cout, H, W, K = 2, 4, 8, 16, 16, 3

    x = jax.random.normal(k_x, (N, Cin, H, W), jnp.float32)
    weight = jax.random.normal(k_w, (Cout, Cin, K, K), jnp.float32) * 0.1
    gamma = jnp.ones((Cout,), jnp.float32)            # BatchNorm2d default init
    beta = jnp.zeros((Cout,), jnp.float32)
    bias = jax.random.normal(k_b, (Cout,), jnp.float32) * 0.1

    fwd_bn = jax.jit(functools.partial(cnn_block, bn_act=True))
    fwd_bias = jax.jit(functools.partial(cnn_block, bn_act=False))

    # bn_act=True path (conv -> bn (batch stats) -> leaky relu)
    out = jax.block_until_ready(fwd_bn(x, weight, gamma=gamma, beta=beta))
    ref = _reference(x, weight, gamma, beta, bn_act=True)
    assert out.shape == (N, Cout, H, W)
    assert jnp.allclose(out, ref, atol=1e-2, rtol=1e-2), float(
        jnp.max(jnp.abs(out - ref)))

    # bn_act=False path (conv + bias only)
    out2 = jax.block_until_ready(fwd_bias(x, weight, bias=bias))
    ref2 = _reference(x, weight, gamma, beta, bn_act=False, bias=bias)
    assert jnp.allclose(out2, ref2, atol=1e-2, rtol=1e-2), float(
        jnp.max(jnp.abs(out2 - ref2)))

    print("KERNEL_OK")
</pallas_src>

<mosaic_0001>
module attributes {stable_mosaic.version = 11 : i64} {
  func.func @_conv_stats_kernel(%arg0: i32, %arg1: i32, %arg2: i32, %arg3: memref<1x18x18x4xbf16, #tpu.memory_space<vmem>>, %arg4: memref<128x36xbf16, #tpu.memory_space<vmem>>, %arg5: memref<1x128x256xbf16, #tpu.memory_space<vmem>>, %arg6: memref<1x1x128x1xf32, #tpu.memory_space<vmem>>, %arg7: memref<1x1x128x1xf32, #tpu.memory_space<vmem>>) attributes {dimension_semantics = [#tpu.dimension_semantics<parallel>, #tpu.dimension_semantics<parallel>, #tpu.dimension_semantics<parallel>], iteration_bounds = array<i64: 2, 1, 1>, scalar_prefetch = 0 : i64, scratch_operands = 0 : i64, tpu.core_type = #tpu.core_type<tc>, window_params = [{transform_indices = @transform_0, window_bounds = array<i64: 1, 18, 18, 4>}, {transform_indices = @transform_1, window_bounds = array<i64: 128, 36>}, {transform_indices = @transform_2, window_bounds = array<i64: 1, 128, 256>}, {transform_indices = @transform_3, window_bounds = array<i64: 1, 1, 128, 1>}, {transform_indices = @transform_4, window_bounds = array<i64: 1, 1, 128, 1>}]} {
    %c16_i32 = arith.constant 16 : i32
    %0 = arith.muli %arg2, %c16_i32 : i32
    %1 = tpu.assume_multiple %0, 16 : i32
    %c0 = arith.constant 0 : index
    %2 = arith.index_cast %1 : i32 to index
    %c0_0 = arith.constant 0 : index
    %c0_1 = arith.constant 0 : index
    %3 = vector.load %arg3[%c0, %2, %c0_0, %c0_1] : memref<1x18x18x4xbf16, #tpu.memory_space<vmem>>, vector<1x18x18x4xbf16>
    %4 = vector.shape_cast %3 : vector<1x18x18x4xbf16> to vector<18x18x4xbf16>
    %5 = vector.extract_strided_slice %4 {offsets = [0, 0, 0], sizes = [16, 16, 4], strides = [1, 1, 1]} : vector<18x18x4xbf16> to vector<16x16x4xbf16>
    %6 = vector.extract_strided_slice %4 {offsets = [0, 1, 0], sizes = [16, 16, 4], strides = [1, 1, 1]} : vector<18x18x4xbf16> to vector<16x16x4xbf16>
    %7 = vector.extract_strided_slice %4 {offsets = [0, 2, 0], sizes = [16, 16, 4], strides = [1, 1, 1]} : vector<18x18x4xbf16> to vector<16x16x4xbf16>
    %8 = vector.extract_strided_slice %4 {offsets = [1, 0, 0], sizes = [16, 16, 4], strides = [1, 1, 1]} : vector<18x18x4xbf16> to vector<16x16x4xbf16>
    %9 = vector.extract_strided_slice %4 {offsets = [1, 1, 0], sizes = [16, 16, 4], strides = [1, 1, 1]} : vector<18x18x4xbf16> to vector<16x16x4xbf16>
    %10 = vector.extract_strided_slice %4 {offsets = [1, 2, 0], sizes = [16, 16, 4], strides = [1, 1, 1]} : vector<18x18x4xbf16> to vector<16x16x4xbf16>
    %11 = vector.extract_strided_slice %4 {offsets = [2, 0, 0], sizes = [16, 16, 4], strides = [1, 1, 1]} : vector<18x18x4xbf16> to vector<16x16x4xbf16>
    %12 = vector.extract_strided_slice %4 {offsets = [2, 1, 0], sizes = [16, 16, 4], strides = [1, 1, 1]} : vector<18x18x4xbf16> to vector<16x16x4xbf16>
    %13 = vector.extract_strided_slice %4 {offsets = [2, 2, 0], sizes = [16, 16, 4], strides = [1, 1, 1]} : vector<18x18x4xbf16> to vector<16x16x4xbf16>
    %14 = tpu.concatenate %5, %6, %7, %8, %9, %10, %11, %12, %13 in 2 : vector<16x16x4xbf16>, vector<16x16x4xbf16>, vector<16x16x4xbf16>, vector<16x16x4xbf16>, vector<16x16x4xbf16>, vector<16x16x4xbf16>, vector<16x16x4xbf16>, vector<16x16x4xbf16>, vector<16x16x4xbf16> -> vector<16x16x36xbf16>
    %15 = vector.shape_cast %14 : vector<16x16x36xbf16> to vector<256x36xbf16>
    %c0_2 = arith.constant 0 : index
    %c0_3 = arith.constant 0 : index
    %16 = vector.load %arg4[%c0_2, %c0_3] : memref<128x36xbf16, #tpu.memory_space<vmem>>, vector<128x36xbf16>
    %cst = arith.constant dense<0.000000e+00> : vector<128x256xf32>
    %17 = tpu.matmul %16, %15, %cst {dimension_numbers = #tpu.dot_dimension_numbers<[1], [1], [0], [0], [0, 0, 1, 0], [], []>} : vector<128x36xbf16>, vector<256x36xbf16>, vector<128x256xf32> -> vector<128x256xf32>
    %cst_4 = arith.constant dense<0.000000e+00> : vector<128xf32>
    %18 = vector.multi_reduction <add>, %17, %cst_4 [1] : vector<128x256xf32> to vector<128xf32>
    %19 = vector.shape_cast %18 : vector<128xf32> to vector<128x1xf32>
    %c0_5 = arith.constant 0 : index
    %c0_6 = arith.constant 0 : index
    %c0_7 = arith.constant 0 : index
    %c0_8 = arith.constant 0 : index
    %20 = vector.load %arg6[%c0_5, %c0_6, %c0_7, %c0_8] : memref<1x1x128x1xf32, #tpu.memory_space<vmem>>, vector<1x1x128x1xf32>
    %21 = vector.shape_cast %20 : vector<1x1x128x1xf32> to vector<128x1xf32>
    %22 = vector.shape_cast %19 : vector<128x1xf32> to vector<1x1x128x1xf32>
    tpu.vector_store %arg6[%c0_5, %c0_6, %c0_7, %c0_8], %22 {strides = array<i32>} : memref<1x1x128x1xf32, #tpu.memory_space<vmem>>, vector<1x1x128x1xf32>,
    %23 = arith.mulf %17, %17 : vector<128x256xf32>
    %cst_9 = arith.constant dense<0.000000e+00> : vector<128xf32>
    %24 = vector.multi_reduction <add>, %23, %cst_9 [1] : vector<128x256xf32> to vector<128xf32>
    %25 = vector.shape_cast %24 : vector<128xf32> to vector<128x1xf32>
    %c0_10 = arith.constant 0 : index
    %c0_11 = arith.constant 0 : index
    %c0_12 = arith.constant 0 : index
    %c0_13 = arith.constant 0 : index
    %26 = vector.load %arg7[%c0_10, %c0_11, %c0_12, %c0_13] : memref<1x1x128x1xf32, #tpu.memory_space<vmem>>, vector<1x1x128x1xf32>
    %27 = vector.shape_cast %26 : vector<1x1x128x1xf32> to vector<128x1xf32>
    %28 = vector.shape_cast %25 : vector<128x1xf32> to vector<1x1x128x1xf32>
    tpu.vector_store %arg7[%c0_10, %c0_11, %c0_12, %c0_13], %28 {strides = array<i32>} : memref<1x1x128x1xf32, #tpu.memory_space<vmem>>, vector<1x1x128x1xf32>,
    %29 = arith.truncf %17 : vector<128x256xf32> to vector<128x256xbf16>
    %c0_14 = arith.constant 0 : index
    %c0_15 = arith.constant 0 : index
    %c0_16 = arith.constant 0 : index
    %30 = vector.load %arg5[%c0_14, %c0_15, %c0_16] : memref<1x128x256xbf16, #tpu.memory_space<vmem>>, vector<1x128x256xbf16>
    %31 = vector.shape_cast %30 : vector<1x128x256xbf16> to vector<128x256xbf16>
    %32 = vector.shape_cast %29 : vector<128x256xbf16> to vector<1x128x256xbf16>
    tpu.vector_store %arg5[%c0_14, %c0_15, %c0_16], %32 {strides = array<i32>} : memref<1x128x256xbf16, #tpu.memory_space<vmem>>, vector<1x128x256xbf16>,
    return
  }
  func.func @transform_0(%arg0: i32, %arg1: i32, %arg2: i32) -> (i32, i32, i32, i32) {
    %c0_i32 = arith.constant 0 : i32
    %c0_i32_0 = arith.constant 0 : i32
    %c0_i32_1 = arith.constant 0 : i32
    %c0_i32_2 = arith.constant 0 : i32
    return %arg0, %c0_i32, %c0_i32_0, %c0_i32_1 : i32, i32, i32, i32
  }
  func.func @transform_1(%arg0: i32, %arg1: i32, %arg2: i32) -> (i32, i32) {
    %c0_i32 = arith.constant 0 : i32
    %c0_i32_0 = arith.constant 0 : i32
    return %arg1, %c0_i32 : i32, i32
  }
  func.func @transform_2(%arg0: i32, %arg1: i32, %arg2: i32) -> (i32, i32, i32) {
    %c0_i32 = arith.constant 0 : i32
    return %arg0, %arg1, %arg2 : i32, i32, i32
  }
  func.func @transform_3(%arg0: i32, %arg1: i32, %arg2: i32) -> (i32, i32, i32, i32) {
    %c0_i32 = arith.constant 0 : i32
    %c0_i32_0 = arith.constant 0 : i32
    return %arg0, %arg2, %arg1, %c0_i32 : i32, i32, i32, i32
  }
  func.func @transform_4(%arg0: i32, %arg1: i32, %arg2: i32) -> (i32, i32, i32, i32) {
    %c0_i32 = arith.constant 0 : i32
    %c0_i32_0 = arith.constant 0 : i32
    return %arg0, %arg2, %arg1, %c0_i32 : i32, i32, i32, i32
  }
}

module attributes {stable_mosaic.version = 11 : i64} {
  func.func @_bn_leaky_kernel(%arg0: i32, %arg1: i32, %arg2: i32, %arg3: memref<1x128x256xbf16, #tpu.memory_space<vmem>>, %arg4: memref<128x1xf32, #tpu.memory_space<vmem>>, %arg5: memref<128x1xf32, #tpu.memory_space<vmem>>, %arg6: memref<1x128x256xf32, #tpu.memory_space<vmem>>) attributes {dimension_semantics = [#tpu.dimension_semantics<parallel>, #tpu.dimension_semantics<parallel>, #tpu.dimension_semantics<parallel>], iteration_bounds = array<i64: 2, 1, 1>, scalar_prefetch = 0 : i64, scratch_operands = 0 : i64, tpu.core_type = #tpu.core_type<tc>, window_params = [{transform_indices = @transform_0, window_bounds = array<i64: 1, 128, 256>}, {transform_indices = @transform_1, window_bounds = array<i64: 128, 1>}, {transform_indices = @transform_2, window_bounds = array<i64: 128, 1>}, {transform_indices = @transform_3, window_bounds = array<i64: 1, 128, 256>}]} {
    %c0 = arith.constant 0 : index
    %c0_0 = arith.constant 0 : index
    %c0_1 = arith.constant 0 : index
    %0 = vector.load %arg3[%c0, %c0_0, %c0_1] : memref<1x128x256xbf16, #tpu.memory_space<vmem>>, vector<1x128x256xbf16>
    %1 = vector.shape_cast %0 : vector<1x128x256xbf16> to vector<128x256xbf16>
    %2 = arith.extf %1 : vector<128x256xbf16> to vector<128x256xf32>
    %c0_2 = arith.constant 0 : index
    %c0_3 = arith.constant 0 : index
    %3 = vector.load %arg4[%c0_2, %c0_3] : memref<128x1xf32, #tpu.memory_space<vmem>>, vector<128x1xf32>
    %4 = vector.broadcast %3 : vector<128x1xf32> to vector<128x256xf32>
    %5 = arith.mulf %2, %4 : vector<128x256xf32>
    %c0_4 = arith.constant 0 : index
    %c0_5 = arith.constant 0 : index
    %6 = vector.load %arg5[%c0_4, %c0_5] : memref<128x1xf32, #tpu.memory_space<vmem>>, vector<128x1xf32>
    %7 = vector.broadcast %6 : vector<128x1xf32> to vector<128x256xf32>
    %8 = arith.addf %5, %7 : vector<128x256xf32>
    %cst = arith.constant 1.000000e-01 : f32
    %9 = vector.broadcast %cst : f32 to vector<128x256xf32>
    %10 = arith.mulf %9, %8 : vector<128x256xf32>
    %11 = arith.maximumf %8, %10 : vector<128x256xf32>
    %c0_6 = arith.constant 0 : index
    %c0_7 = arith.constant 0 : index
    %c0_8 = arith.constant 0 : index
    %12 = vector.load %arg6[%c0_6, %c0_7, %c0_8] : memref<1x128x256xf32, #tpu.memory_space<vmem>>, vector<1x128x256xf32>
    %13 = vector.shape_cast %12 : vector<1x128x256xf32> to vector<128x256xf32>
    %14 = vector.shape_cast %11 : vector<128x256xf32> to vector<1x128x256xf32>
    tpu.vector_store %arg6[%c0_6, %c0_7, %c0_8], %14 {strides = array<i32>} : memref<1x128x256xf32, #tpu.memory_space<vmem>>, vector<1x128x256xf32>,
    return
  }
  func.func @transform_0(%arg0: i32, %arg1: i32, %arg2: i32) -> (i32, i32, i32) {
    %c0_i32 = arith.constant 0 : i32
    return %arg0, %arg1, %arg2 : i32, i32, i32
  }
  func.func @transform_1(%arg0: i32, %arg1: i32, %arg2: i32) -> (i32, i32) {
    %c0_i32 = arith.constant 0 : i32
    %c0_i32_0 = arith.constant 0 : i32
    return %arg1, %c0_i32 : i32, i32
  }
  func.func @transform_2(%arg0: i32, %arg1: i32, %arg2: i32) -> (i32, i32) {
    %c0_i32 = arith.constant 0 : i32
    %c0_i32_0 = arith.constant 0 : i32
    return %arg1, %c0_i32 : i32, i32
  }
  func.func @transform_3(%arg0: i32, %arg1: i32, %arg2: i32) -> (i32, i32, i32) {
    %c0_i32 = arith.constant 0 : i32
    return %arg0, %arg1, %arg2 : i32, i32, i32
  }
}

</mosaic_0001>

<llo_original>
// kernel: cnn_block.3
$region0: #{cnn_block.3}
  #allocation0 [shape = 'u32[]', space=smem, size = 0x4, offset = 0x4, fixed_abs, tag = 'smem constant byte address 0x4 - core index']
  #allocation1 [shape = 'u32[144,128]{1,0:T(1,128)}', space=vmem, size = 0x12000, scoped, tag = 'internal scratch']
  %s0 = inlined_call_operand.vmem [shape: bf16[2,128,256], index: 0, kind: input, shape index: {}]
  %s1 = inlined_call_operand.vmem [shape: f32[128,1], index: 1, kind: input, shape index: {}]
  %s2 = inlined_call_operand.vmem [shape: f32[128,1], index: 2, kind: input, shape index: {}]
  %s3 = inlined_call_operand.vmem [shape: f32[2,128,256], index: 3, kind: output, shape index: {}]
  %s4 = sld [smem:[#allocation0]]
  $region45: #{cnn_block.3} parent=0
    _
  %s6 = ssub.s32 1, %s4
  %s7 = scalar_select 0, %s6, %s4
  loop: start=0, step=1, limit=4
  $region2: #{cnn_block.3} parent=0 // loop_pre_header
    _
  $region3: #{cnn_block.3} parent=0 // loop_header
    %s9 = sphi 0, %s13
    %p10 = scmp.ge.s32.totalorder %s9, 4
    %s16 = sphi 0, %s35
    %s17 = sphi 0, %s31
    %s18 = sphi 0, %s27
    %s19 = sphi 0, %s16
    %s20 = sphi 0, %s17
    %s21 = sphi 0, %s18
    %s22 = sphi 0, %s19
    %s23 = sphi 0, %s20
    %s24 = sphi 0, %s21
    %s42 = sphi 0, %s44
    %s45 = sphi 0, %s42
    %s46 = sphi 0, %s45
    %s62 = sphi 0, %s46
    %s68 = sphi 0, %s70
    %s71 = sphi 0, %s68
    %s72 = sphi 0, %s71
    %s88 = sphi 0, %s72
    %s94 = sphi 0, %s96
    %s97 = sphi 0, %s94
    %s98 = sphi 0, %s97
    %s114 = sphi 0, %s98
    %s124 = sphi 0, %s126
    %s127 = sphi 0, %s124
    %s128 = sphi 0, %s127
    %s144 = sphi 0, %s128
  $region4: #{cnn_block.3} parent=0 // loop_header_branch
    %12 = sbr.rel (%p10) target = $region8
  $region5: #{cnn_block.3} parent=0 // loop_body
    %s14 = ssub.s32 %s9, 1
    %s15 = ssub.s32 %s9, 2
    %s25 = sadd.s32 1, %s18
    %p26 = scmp.ge.s32.totalorder %s25, 1
    %s27 = scalar_select %p26, 0, %s25
    %s28 = sadd.s32 1, %s17
    %s29 = scalar_select %p26, %s28, %s17
    %p30 = scmp.ge.s32.totalorder %s29, 1
    %s31 = scalar_select %p30, 0, %s29
    %s32 = sadd.s32 1, %s16
    %s33 = scalar_select %p30, %s32, %s16
    %p34 = scmp.ge.s32.totalorder %s33, 2
    %s35 = scalar_select %p34, 0, %s33
    %s36 = ssub.s32 %s16, %s35
    %s37 = ssub.s32 %s17, %s31
    %s38 = sor.u32 %s36, %s37
    %s39 = ssub.s32 %s18, %s27
    %s40 = sor.u32 %s38, %s39
    %p41 = scmp.eq.s32.totalorder %s40, 0
    %s43 = sadd.s32 %s42, 1
    %s44 = scalar_select %p41, %s42, %s43
    %p47 = pneg %p41
    %p48 = scmp.eq.s32.totalorder %s9, 1
    %p49 = por %p47, %p48
    %p50 = scmp.ne.s32.totalorder %s42, %s45
    %p51 = scmp.eq.s32.totalorder %s9, 0
    %p52 = por %p50, %p51
    %p53 = scmp.ne.s32.totalorder %s42, %s45
    %p54 = scmp.eq.s32.totalorder %s14, 1
    %p55 = por %p53, %p54
    %p56 = scmp.ne.s32.totalorder %s45, %s46
    %p57 = scmp.eq.s32.totalorder %s14, 0
    %p58 = por %p56, %p57
    %p59 = scmp.ne.s32.totalorder %s45, %s46
    %p60 = scmp.eq.s32.totalorder %s15, 1
    %p61 = por %p59, %p60
    %p63 = scmp.ne.s32.totalorder %s46, %s62
    %p64 = scmp.eq.s32.totalorder %s15, 0
    %p65 = por %p63, %p64
    %s66 = ssub.s32 %s17, %s31
    %p67 = scmp.eq.s32.totalorder %s66, 0
    %s69 = sadd.s32 %s68, 1
    %s70 = scalar_select %p67, %s68, %s69
    %p73 = pneg %p67
    %p74 = scmp.eq.s32.totalorder %s9, 1
    %p75 = por %p73, %p74
    %p76 = scmp.ne.s32.totalorder %s68, %s71
    %p77 = scmp.eq.s32.totalorder %s9, 0
    %p78 = por %p76, %p77
    %p79 = scmp.ne.s32.totalorder %s68, %s71
    %p80 = scmp.eq.s32.totalorder %s14, 1
    %p81 = por %p79, %p80
    %p82 = scmp.ne.s32.totalorder %s71, %s72
    %p83 = scmp.eq.s32.totalorder %s14, 0
    %p84 = por %p82, %p83
    %p85 = scmp.ne.s32.totalorder %s71, %s72
    %p86 = scmp.eq.s32.totalorder %s15, 1
    %p87 = por %p85, %p86
    %p89 = scmp.ne.s32.totalorder %s72, %s88
    %p90 = scmp.eq.s32.totalorder %s15, 0
    %p91 = por %p89, %p90
    %s92 = ssub.s32 %s17, %s31
    %p93 = scmp.eq.s32.totalorder %s92, 0
    %s95 = sadd.s32 %s94, 1
    %s96 = scalar_select %p93, %s94, %s95
    %p99 = pneg %p93
    %p100 = scmp.eq.s32.totalorder %s9, 1
    %p101 = por %p99, %p100
    %p102 = scmp.ne.s32.totalorder %s94, %s97
    %p103 = scmp.eq.s32.totalorder %s9, 0
    %p104 = por %p102, %p103
    %p105 = scmp.ne.s32.totalorder %s94, %s97
    %p106 = scmp.eq.s32.totalorder %s14, 1
    %p107 = por %p105, %p106
    %p108 = scmp.ne.s32.totalorder %s97, %s98
    %p109 = scmp.eq.s32.totalorder %s14, 0
    %p110 = por %p108, %p109
    %p111 = scmp.ne.s32.totalorder %s97, %s98
    %p112 = scmp.eq.s32.totalorder %s15, 1
    %p113 = por %p111, %p112
    %p115 = scmp.ne.s32.totalorder %s98, %s114
    %p116 = scmp.eq.s32.totalorder %s15, 0
    %p117 = por %p115, %p116
    %s118 = ssub.s32 %s16, %s35
    %s119 = ssub.s32 %s17, %s31
    %s120 = sor.u32 %s118, %s119
    %s121 = ssub.s32 %s18, %s27
    %s122 = sor.u32 %s120, %s121
    %p123 = scmp.eq.s32.totalorder %s122, 0
    %s125 = sadd.s32 %s124, 1
    %s126 = scalar_select %p123, %s124, %s125
    %p129 = pneg %p123
    %p130 = scmp.eq.s32.totalorder %s9, 1
    %p131 = por %p129, %p130
    %p132 = scmp.ne.s32.totalorder %s124, %s127
    %p133 = scmp.eq.s32.totalorder %s9, 0
    %p134 = por %p132, %p133
    %p135 = scmp.ne.s32.totalorder %s124, %s127
    %p136 = scmp.eq.s32.totalorder %s14, 1
    %p137 = por %p135, %p136
    %p138 = scmp.ne.s32.totalorder %s127, %s128
    %p139 = scmp.eq.s32.totalorder %s14, 0
    %p140 = por %p138, %p139
    %p141 = scmp.ne.s32.totalorder %s127, %s128
    %p142 = scmp.eq.s32.totalorder %s15, 1
    %p143 = por %p141, %p142
    %p145 = scmp.ne.s32.totalorder %s128, %s144
    %p146 = scmp.eq.s32.totalorder %s15, 0
    %p147 = por %p145, %p146
    %p148 = scmp.le.s32.totalorder 1, %s9
    %p149 = scmp.lt.s32.totalorder %s9, 3
    %p150 = pnand %p148, %p149
    %p151 = pneg %p150
    // Predicated region
    $region9: #{cnn_block.3} parent=5 // pred_check
      _
    $region10: #{cnn_block.3} parent=5 // pred_check_branch
      %153 = sbr.rel (%p150) target = $region12
    $region11: #{cnn_block.3} parent=5 // pred_region
      %s154 = ssub.s32 %s9, 1
      // Predicated region
      $region13: #{cnn_block.3} parent=11 // pred_check
        %p155 = pneg %p84
      $region14: #{cnn_block.3} parent=11 // pred_check_branch
        %157 = sbr.rel (%p155) target = $region16
      $region15: #{cnn_block.3} parent=11 // pred_region
        %s158 = smul.u32 16, %s20
        %p159 = scmp.lt.s32.totalorder %s158, 15
        %s160 = scalar_select %p159, %s158, 15
        %s161 = smul.addr %s160, 8
        %s162 = scalar_lea.vmem %s1, %s161
        %s163 = smul.u32 16, %s20
      $region16: #{cnn_block.3} parent=11 // pred_fallthru
        _
      // Predicated region
      $region17: #{cnn_block.3} parent=11 // pred_check
        %p164 = pneg %p110
      $region18: #{cnn_block.3} parent=11 // pred_check_branch
        %166 = sbr.rel (%p164) target = $region20
      $region19: #{cnn_block.3} parent=11 // pred_region
        %s167 = smul.u32 16, %s20
        %p168 = scmp.lt.s32.totalorder %s167, 15
        %s169 = scalar_select %p168, %s167, 15
        %s170 = smul.addr %s169, 8
        %s171 = scalar_lea.vmem %s2, %s170
        %s172 = smul.u32 16, %s20
      $region20: #{cnn_block.3} parent=11 // pred_fallthru
        _
    $region12: #{cnn_block.3} parent=5 // pred_fallthru
      _
    %p173 = scmp.lt.s32.totalorder %s9, 2
    // Predicated region
    $region21: #{cnn_block.3} parent=5 // pred_check
      %p174 = pneg %p173
    $region22: #{cnn_block.3} parent=5 // pred_check_branch
      %176 = sbr.rel (%p174) target = $region24
    $region23: #{cnn_block.3} parent=5 // pred_region
      // Predicated region
      $region25: #{cnn_block.3} parent=23 // pred_check
        %p177 = pneg %p52
      $region26: #{cnn_block.3} parent=23 // pred_check_branch
        %179 = sbr.rel (%p177) target = $region28
      $region27: #{cnn_block.3} parent=23 // pred_region
        %s180 = smul.u32 16, %s17
        %s181 = smul.u32 2, %s18
        %p182 = scmp.lt.s32.totalorder %s16, 1
        %s183 = scalar_select %p182, %s16, 1
        %p184 = scmp.lt.s32.totalorder %s180, 15
        %s185 = scalar_select %p184, %s180, 15
        %p186 = scmp.lt.s32.totalorder %s181, 1
        %s187 = scalar_select %p186, %s181, 1
        %s188 = smul.addr %s185, 2
        %s189 = sadd.s32 %s187, %s188
        %s190 = smul.addr %s183, 32
        %s191 = sadd.s32 %s189, %s190
        %s192 = smul.addr %s191, 4
        %s193 = scalar_lea.vmem %s0, %s192
        %s194 = smul.u32 16, %s17
        %s195 = smul.u32 2, %s18
      $region28: #{cnn_block.3} parent=23 // pred_fallthru
        _
    $region24: #{cnn_block.3} parent=5 // pred_fallthru
      _
    %p196 = scmp.le.s32.totalorder 1, %s9
    %p197 = scmp.lt.s32.totalorder %s9, 3
    %p198 = pnand %p196, %p197
    %p199 = pneg %p198
    // Predicated region
    $region29: #{cnn_block.3} parent=5 // pred_check
      _
    $region30: #{cnn_block.3} parent=5 // pred_check_branch
      %201 = sbr.rel (%p198) target = $region32
    $region31: #{cnn_block.3} parent=5 // pred_region
      %s202 = ssub.s32 %s9, 1
      %s203 = smul.u32 16, %s20
      %s204 = smul.u32 2, %s21
      %p205 = scmp.lt.s32.totalorder %s19, 1
      %s206 = scalar_select %p205, %s19, 1
      %p207 = scmp.lt.s32.totalorder %s203, 15
      %s208 = scalar_select %p207, %s203, 15
      %p209 = scmp.lt.s32.totalorder %s204, 1
      %s210 = scalar_select %p209, %s204, 1
      %s211 = smul.addr %s208, 2
      %s212 = sadd.s32 %s210, %s211
      %s213 = smul.addr %s206, 32
      %s214 = sadd.s32 %s212, %s213
      %s215 = smul.addr %s214, 4
      %s216 = scalar_lea.vmem %s0, %s215
      %p217 = pneg %p58
      %p218 = pneg %p55
      %s219 = smul.u32 16, %s20
      %p220 = scmp.lt.s32.totalorder %s219, 15
      %s221 = scalar_select %p220, %s219, 15
      %s222 = smul.addr %s221, 8
      %s223 = scalar_lea.vmem %s1, %s222
      %p224 = pneg %p84
      %p225 = pneg %p81
      %s226 = smul.u32 16, %s20
      %p227 = scmp.lt.s32.totalorder %s226, 15
      %s228 = scalar_select %p227, %s226, 15
      %s229 = smul.addr %s228, 8
      %s230 = scalar_lea.vmem %s2, %s229
      %p231 = pneg %p110
      %p232 = pneg %p107
      %p233 = pneg %p140
      %p234 = pneg %p137
      %s235 = smul.u32 16, %s20
      %s236 = smul.u32 2, %s21
      %p237 = scmp.lt.s32.totalorder %s19, 1
      %s238 = scalar_select %p237, %s19, 1
      %p239 = scmp.lt.s32.totalorder %s235, 15
      %s240 = scalar_select %p239, %s235, 15
      %p241 = scmp.lt.s32.totalorder %s236, 1
      %s242 = scalar_select %p241, %s236, 1
      %s243 = smul.addr %s240, 2
      %s244 = sadd.s32 %s242, %s243
      %s245 = smul.addr %s238, 32
      %s246 = sadd.s32 %s244, %s245
      %s247 = smul.addr %s246, 8
      %s248 = scalar_lea.vmem %s3, %s247
      %s249 = smul.u32 16, %s20
      %s250 = smul.u32 2, %s21
      %p251 = scmp.lt.s32.totalorder %s19, 1
      %s252 = scalar_select %p251, %s19, 1
      %p253 = scmp.lt.s32.totalorder %s249, 15
      %s254 = scalar_select %p253, %s249, 15
      %p255 = scmp.lt.s32.totalorder %s250, 1
      %s256 = scalar_select %p255, %s250, 1
      %s257 = smul.addr %s254, 2
      %s258 = sadd.s32 %s256, %s257
      %s259 = smul.addr %s252, 32
      %s260 = sadd.s32 %s258, %s259
      %s261 = smul.addr %s260, 4
      %s262 = scalar_lea.vmem %s0, %s261
      %s263 = smul.u32 16, %s20
      %s264 = smul.u32 2, %s21
      %s265 = smul.u32 16, %s20
      %p266 = scmp.lt.s32.totalorder %s265, 15
      %s267 = scalar_select %p266, %s265, 15
      %s268 = smul.addr %s267, 8
      %s269 = scalar_lea.vmem %s1, %s268
      %s270 = smul.u32 16, %s20
      %s271 = smul.u32 16, %s20
      %p272 = scmp.lt.s32.totalorder %s271, 15
      %s273 = scalar_select %p272, %s271, 15
      %s274 = smul.addr %s273, 8
      %s275 = scalar_lea.vmem %s2, %s274
      %s276 = smul.u32 16, %s20
      %s277 = smul.u32 16, %s20
      %s278 = smul.u32 2, %s21
      %p279 = scmp.lt.s32.totalorder %s19, 1
      %s280 = scalar_select %p279, %s19, 1
      %p281 = scmp.lt.s32.totalorder %s277, 15
      %s282 = scalar_select %p281, %s277, 15
      %p283 = scmp.lt.s32.totalorder %s278, 1
      %s284 = scalar_select %p283, %s278, 1
      %s285 = smul.addr %s282, 2
      %s286 = sadd.s32 %s284, %s285
      %s287 = smul.addr %s280, 32
      %s288 = sadd.s32 %s286, %s287
      %s289 = smul.addr %s288, 8
      %s290 = scalar_lea.vmem %s3, %s289
      %s291 = smul.u32 16, %s20
      %s292 = smul.u32 2, %s21
      %v293 = vld [vmem:[%s262] sm:$0xff]
      %v294 = vld [vmem:[%s262 + $0x8] sm:$0xff]
      %v295 = vld [vmem:[%s262 + $0x10] sm:$0xff]
      %v296 = vld [vmem:[%s262 + $0x18] sm:$0xff]
      %v297 = vld [vmem:[%s262 + $0x20] sm:$0xff]
      %v298 = vld [vmem:[%s262 + $0x28] sm:$0xff]
      %v299 = vld [vmem:[%s262 + $0x30] sm:$0xff]
      %v300 = vld [vmem:[%s262 + $0x38] sm:$0xff]
      %v301 = vld [vmem:[%s262 + $0x40] sm:$0xff]
      %v302 = vld [vmem:[%s262 + $0x48] sm:$0xff]
      %v303 = vld [vmem:[%s262 + $0x50] sm:$0xff]
      %v304 = vld [vmem:[%s262 + $0x58] sm:$0xff]
      %v305 = vld [vmem:[%s262 + $0x60] sm:$0xff]
      %v306 = vld [vmem:[%s262 + $0x68] sm:$0xff]
      %v307 = vld [vmem:[%s262 + $0x70] sm:$0xff]
      %v308 = vld [vmem:[%s262 + $0x78] sm:$0xff]
      %v309 = vunpack.c.l.bf16 %v293
      %v310 = vunpack.c.h.bf16 %v293
      %v311 = vunpack.c.l.bf16 %v294
      %v312 = vunpack.c.h.bf16 %v294
      %v313 = vunpack.c.l.bf16 %v295
      %v314 = vunpack.c.h.bf16 %v295
      %v315 = vunpack.c.l.bf16 %v296
      %v316 = vunpack.c.h.bf16 %v296
      %v317 = vunpack.c.l.bf16 %v297
      %v318 = vunpack.c.h.bf16 %v297
      %v319 = vunpack.c.l.bf16 %v298
      %v320 = vunpack.c.h.bf16 %v298
      %v321 = vunpack.c.l.bf16 %v299
      %v322 = vunpack.c.h.bf16 %v299
      %v323 = vunpack.c.l.bf16 %v300
      %v324 = vunpack.c.h.bf16 %v300
      %v325 = vunpack.c.l.bf16 %v301
      %v326 = vunpack.c.h.bf16 %v301
      %v327 = vunpack.c.l.bf16 %v302
      %v328 = vunpack.c.h.bf16 %v302
      %v329 = vunpack.c.l.bf16 %v303
      %v330 = vunpack.c.h.bf16 %v303
      %v331 = vunpack.c.l.bf16 %v304
      %v332 = vunpack.c.h.bf16 %v304
      %v333 = vunpack.c.l.bf16 %v305
      %v334 = vunpack.c.h.bf16 %v305
      %v335 = vunpack.c.l.bf16 %v306
      %v336 = vunpack.c.h.bf16 %v306
      %v337 = vunpack.c.l.bf16 %v307
      %v338 = vunpack.c.h.bf16 %v307
      %v339 = vunpack.c.l.bf16 %v308
      %v340 = vunpack.c.h.bf16 %v308
      %v341 = vld [vmem:[%s269] sm:$0xff]
      %v342 = vld [vmem:[%s269 + $0x8] sm:$0xff]
      %v343 = vld [vmem:[%s269 + $0x10] sm:$0xff]
      %v344 = vld [vmem:[%s269 + $0x18] sm:$0xff]
      %v345 = vld [vmem:[%s269 + $0x20] sm:$0xff]
      %v346 = vld [vmem:[%s269 + $0x28] sm:$0xff]
      %v347 = vld [vmem:[%s269 + $0x30] sm:$0xff]
      %v348 = vld [vmem:[%s269 + $0x38] sm:$0xff]
      %v349 = vld [vmem:[%s269 + $0x40] sm:$0xff]
      %v350 = vld [vmem:[%s269 + $0x48] sm:$0xff]
      %v351 = vld [vmem:[%s269 + $0x50] sm:$0xff]
      %v352 = vld [vmem:[%s269 + $0x58] sm:$0xff]
      %v353 = vld [vmem:[%s269 + $0x60] sm:$0xff]
      %v354 = vld [vmem:[%s269 + $0x68] sm:$0xff]
      %v355 = vld [vmem:[%s269 + $0x70] sm:$0xff]
      %v356 = vld [vmem:[%s269 + $0x78] sm:$0xff]
      %358 = vset.pattern.permute.xlu0 0
      %359 = vperm.xlu0 %358, %v341
      %v360 = vpop.permute.xlu0 %359
      %363 = vset.pattern.permute.xlu0 0
      %364 = vperm.xlu0 %363, %v342
      %v365 = vpop.permute.xlu0 %364
      %368 = vset.pattern.permute.xlu0 0
      %369 = vperm.xlu0 %368, %v343
      %v370 = vpop.permute.xlu0 %369
      %373 = vset.pattern.permute.xlu0 0
      %374 = vperm.xlu0 %373, %v344
      %v375 = vpop.permute.xlu0 %374
      %378 = vset.pattern.permute.xlu0 0
      %379 = vperm.xlu0 %378, %v345
      %v380 = vpop.permute.xlu0 %379
      %383 = vset.pattern.permute.xlu0 0
      %384 = vperm.xlu0 %383, %v346
      %v385 = vpop.permute.xlu0 %384
      %388 = vset.pattern.permute.xlu0 0
      %389 = vperm.xlu0 %388, %v347
      %v390 = vpop.permute.xlu0 %389
      %393 = vset.pattern.permute.xlu0 0
      %394 = vperm.xlu0 %393, %v348
      %v395 = vpop.permute.xlu0 %394
      %398 = vset.pattern.permute.xlu0 0
      %399 = vperm.xlu0 %398, %v349
      %v400 = vpop.permute.xlu0 %399
      %403 = vset.pattern.permute.xlu0 0
      %404 = vperm.xlu0 %403, %v350
      %v405 = vpop.permute.xlu0 %404
      %408 = vset.pattern.permute.xlu0 0
      %409 = vperm.xlu0 %408, %v351
      %v410 = vpop.permute.xlu0 %409
      %413 = vset.pattern.permute.xlu0 0
      %414 = vperm.xlu0 %413, %v352
      %v415 = vpop.permute.xlu0 %414
      %418 = vset.pattern.permute.xlu0 0
      %419 = vperm.xlu0 %418, %v353
      %v420 = vpop.permute.xlu0 %419
      %423 = vset.pattern.permute.xlu0 0
      %424 = vperm.xlu0 %423, %v354
      %v425 = vpop.permute.xlu0 %424
      %428 = vset.pattern.permute.xlu0 0
      %429 = vperm.xlu0 %428, %v355
      %v430 = vpop.permute.xlu0 %429
      %433 = vset.pattern.permute.xlu0 0
      %434 = vperm.xlu0 %433, %v356
      %v435 = vpop.permute.xlu0 %434
      %v437 = vmul.f32 %v309, %v360
      %v438 = vmul.f32 %v310, %v360
      %v439 = vmul.f32 %v311, %v365
      %v440 = vmul.f32 %v312, %v365
      %v441 = vmul.f32 %v313, %v370
      %v442 = vmul.f32 %v314, %v370
      %v443 = vmul.f32 %v315, %v375
      %v444 = vmul.f32 %v316, %v375
      %v445 = vmul.f32 %v317, %v380
      %v446 = vmul.f32 %v318, %v380
      %v447 = vmul.f32 %v319, %v385
      %v448 = vmul.f32 %v320, %v385
      %v449 = vmul.f32 %v321, %v390
      %v450 = vmul.f32 %v322, %v390
      %v451 = vmul.f32 %v323, %v395
      %v452 = vmul.f32 %v324, %v395
      %v453 = vmul.f32 %v325, %v400
      %v454 = vmul.f32 %v326, %v400
      %v455 = vmul.f32 %v327, %v405
      %v456 = vmul.f32 %v328, %v405
      %v457 = vmul.f32 %v329, %v410
      %v458 = vmul.f32 %v330, %v410
      %v459 = vmul.f32 %v331, %v415
      %v460 = vmul.f32 %v332, %v415
      %v461 = vmul.f32 %v333, %v420
      %v462 = vmul.f32 %v334, %v420
      %v463 = vmul.f32 %v335, %v425
      %v464 = vmul.f32 %v336, %v425
      %v465 = vmul.f32 %v337, %v430
      %v466 = vmul.f32 %v338, %v430
      %v467 = vmul.f32 %v339, %v435
      %v468 = vmul.f32 %v340, %v435
      %v469 = vld [vmem:[%s275] sm:$0xff]
      %v470 = vld [vmem:[%s275 + $0x8] sm:$0xff]
      %v471 = vld [vmem:[%s275 + $0x10] sm:$0xff]
      %v472 = vld [vmem:[%s275 + $0x18] sm:$0xff]
      %v473 = vld [vmem:[%s275 + $0x20] sm:$0xff]
      %v474 = vld [vmem:[%s275 + $0x28] sm:$0xff]
      %v475 = vld [vmem:[%s275 + $0x30] sm:$0xff]
      %v476 = vld [vmem:[%s275 + $0x38] sm:$0xff]
      %v477 = vld [vmem:[%s275 + $0x40] sm:$0xff]
      %v478 = vld [vmem:[%s275 + $0x48] sm:$0xff]
      %v479 = vld [vmem:[%s275 + $0x50] sm:$0xff]
      %v480 = vld [vmem:[%s275 + $0x58] sm:$0xff]
      %v481 = vld [vmem:[%s275 + $0x60] sm:$0xff]
      %v482 = vld [vmem:[%s275 + $0x68] sm:$0xff]
      %v483 = vld [vmem:[%s275 + $0x70] sm:$0xff]
      %v484 = vld [vmem:[%s275 + $0x78] sm:$0xff]
      %486 = vset.pattern.permute.xlu0 0
      %487 = vperm.xlu0 %486, %v469
      %v488 = vpop.permute.xlu0 %487
      %491 = vset.pattern.permute.xlu0 0
      %492 = vperm.xlu0 %491, %v470
      %v493 = vpop.permute.xlu0 %492
      %496 = vset.pattern.permute.xlu0 0
      %497 = vperm.xlu0 %496, %v471
      %v498 = vpop.permute.xlu0 %497
      %501 = vset.pattern.permute.xlu0 0
      %502 = vperm.xlu0 %501, %v472
      %v503 = vpop.permute.xlu0 %502
      %506 = vset.pattern.permute.xlu0 0
      %507 = vperm.xlu0 %506, %v473
      %v508 = vpop.permute.xlu0 %507
      %511 = vset.pattern.permute.xlu0 0
      %512 = vperm.xlu0 %511, %v474
      %v513 = vpop.permute.xlu0 %512
      %516 = vset.pattern.permute.xlu0 0
      %517 = vperm.xlu0 %516, %v475
      %v518 = vpop.permute.xlu0 %517
      %521 = vset.pattern.permute.xlu0 0
      %522 = vperm.xlu0 %521, %v476
      %v523 = vpop.permute.xlu0 %522
      %526 = vset.pattern.permute.xlu0 0
      %527 = vperm.xlu0 %526, %v477
      %v528 = vpop.permute.xlu0 %527
      %531 = vset.pattern.permute.xlu0 0
      %532 = vperm.xlu0 %531, %v478
      %v533 = vpop.permute.xlu0 %532
      %536 = vset.pattern.permute.xlu0 0
      %537 = vperm.xlu0 %536, %v479
      %v538 = vpop.permute.xlu0 %537
      %541 = vset.pattern.permute.xlu0 0
      %542 = vperm.xlu0 %541, %v480
      %v543 = vpop.permute.xlu0 %542
      %546 = vset.pattern.permute.xlu0 0
      %547 = vperm.xlu0 %546, %v481
      %v548 = vpop.permute.xlu0 %547
      %551 = vset.pattern.permute.xlu0 0
      %552 = vperm.xlu0 %551, %v482
      %v553 = vpop.permute.xlu0 %552
      %556 = vset.pattern.permute.xlu0 0
      %557 = vperm.xlu0 %556, %v483
      %v558 = vpop.permute.xlu0 %557
      %561 = vset.pattern.permute.xlu0 0
      %562 = vperm.xlu0 %561, %v484
      %v563 = vpop.permute.xlu0 %562
      %v565 = vadd.f32 %v437, %v488
      %v566 = vadd.f32 %v438, %v488
      %v567 = vadd.f32 %v439, %v493
      %v568 = vadd.f32 %v440, %v493
      %v569 = vadd.f32 %v441, %v498
      %v570 = vadd.f32 %v442, %v498
      %v571 = vadd.f32 %v443, %v503
      %v572 = vadd.f32 %v444, %v503
      %v573 = vadd.f32 %v445, %v508
      %v574 = vadd.f32 %v446, %v508
      %v575 = vadd.f32 %v447, %v513
      %v576 = vadd.f32 %v448, %v513
      %v577 = vadd.f32 %v449, %v518
      %v578 = vadd.f32 %v450, %v518
      %v579 = vadd.f32 %v451, %v523
      %v580 = vadd.f32 %v452, %v523
      %v581 = vadd.f32 %v453, %v528
      %v582 = vadd.f32 %v454, %v528
      %v583 = vadd.f32 %v455, %v533
      %v584 = vadd.f32 %v456, %v533
      %v585 = vadd.f32 %v457, %v538
      %v586 = vadd.f32 %v458, %v538
      %v587 = vadd.f32 %v459, %v543
      %v588 = vadd.f32 %v460, %v543
      %v589 = vadd.f32 %v461, %v548
      %v590 = vadd.f32 %v462, %v548
      %v591 = vadd.f32 %v463, %v553
      %v592 = vadd.f32 %v464, %v553
      %v593 = vadd.f32 %v465, %v558
      %v594 = vadd.f32 %v466, %v558
      %v595 = vadd.f32 %v467, %v563
      %v596 = vadd.f32 %v468, %v563
      %v597 = vmul.f32 %v565, 0.1
      %v598 = vmul.f32 %v566, 0.1
      %v599 = vmul.f32 %v567, 0.1
      %v600 = vmul.f32 %v568, 0.1
      %v601 = vmul.f32 %v569, 0.1
      %v602 = vmul.f32 %v570, 0.1
      %v603 = vmul.f32 %v571, 0.1
      %v604 = vmul.f32 %v572, 0.1
      %v605 = vmul.f32 %v573, 0.1
      %v606 = vmul.f32 %v574, 0.1
      %v607 = vmul.f32 %v575, 0.1
      %v608 = vmul.f32 %v576, 0.1
      %v609 = vmul.f32 %v577, 0.1
      %v610 = vmul.f32 %v578, 0.1
      %v611 = vmul.f32 %v579, 0.1
      %v612 = vmul.f32 %v580, 0.1
      %v613 = vmul.f32 %v581, 0.1
      %v614 = vmul.f32 %v582, 0.1
      %v615 = vmul.f32 %v583, 0.1
      %v616 = vmul.f32 %v584, 0.1
      %v617 = vmul.f32 %v585, 0.1
      %v618 = vmul.f32 %v586, 0.1
      %v619 = vmul.f32 %v587, 0.1
      %v620 = vmul.f32 %v588, 0.1
      %v621 = vmul.f32 %v589, 0.1
      %v622 = vmul.f32 %v590, 0.1
      %v623 = vmul.f32 %v591, 0.1
      %v624 = vmul.f32 %v592, 0.1
      %v625 = vmul.f32 %v593, 0.1
      %v626 = vmul.f32 %v594, 0.1
      %v627 = vmul.f32 %v595, 0.1
      %v628 = vmul.f32 %v596, 0.1
      %v629 = vmax.f32 %v565, %v597
      %v630 = vmax.f32 %v566, %v598
      %v631 = vmax.f32 %v567, %v599
      %v632 = vmax.f32 %v568, %v600
      %v633 = vmax.f32 %v569, %v601
      %v634 = vmax.f32 %v570, %v602
      %v635 = vmax.f32 %v571, %v603
      %v636 = vmax.f32 %v572, %v604
      %v637 = vmax.f32 %v573, %v605
      %v638 = vmax.f32 %v574, %v606
      %v639 = vmax.f32 %v575, %v607
      %v640 = vmax.f32 %v576, %v608
      %v641 = vmax.f32 %v577, %v609
      %v642 = vmax.f32 %v578, %v610
      %v643 = vmax.f32 %v579, %v611
      %v644 = vmax.f32 %v580, %v612
      %v645 = vmax.f32 %v581, %v613
      %v646 = vmax.f32 %v582, %v614
      %v647 = vmax.f32 %v583, %v615
      %v648 = vmax.f32 %v584, %v616
      %v649 = vmax.f32 %v585, %v617
      %v650 = vmax.f32 %v586, %v618
      %v651 = vmax.f32 %v587, %v619
      %v652 = vmax.f32 %v588, %v620
      %v653 = vmax.f32 %v589, %v621
      %v654 = vmax.f32 %v590, %v622
      %v655 = vmax.f32 %v591, %v623
      %v656 = vmax.f32 %v592, %v624
      %v657 = vmax.f32 %v593, %v625
      %v658 = vmax.f32 %v594, %v626
      %v659 = vmax.f32 %v595, %v627
      %v660 = vmax.f32 %v596, %v628
      %661 = vst [vmem:[%s290] sm:$0xff] %v629
      %662 = vst [vmem:[%s290 + $0x8] sm:$0xff] %v630
      %663 = vst [vmem:[%s290 + $0x10] sm:$0xff] %v631
      %664 = vst [vmem:[%s290 + $0x18] sm:$0xff] %v632
      %665 = vst [vmem:[%s290 + $0x20] sm:$0xff] %v633
      %666 = vst [vmem:[%s290 + $0x28] sm:$0xff] %v634
      %667 = vst [vmem:[%s290 + $0x30] sm:$0xff] %v635
      %668 = vst [vmem:[%s290 + $0x38] sm:$0xff] %v636
      %669 = vst [vmem:[%s290 + $0x40] sm:$0xff] %v637
      %670 = vst [vmem:[%s290 + $0x48] sm:$0xff] %v638
      %671 = vst [vmem:[%s290 + $0x50] sm:$0xff] %v639
      %672 = vst [vmem:[%s290 + $0x58] sm:$0xff] %v640
      %673 = vst [vmem:[%s290 + $0x60] sm:$0xff] %v641
      %674 = vst [vmem:[%s290 + $0x68] sm:$0xff] %v642
      %675 = vst [vmem:[%s290 + $0x70] sm:$0xff] %v643
      %676 = vst [vmem:[%s290 + $0x78] sm:$0xff] %v644
      %677 = vst [vmem:[%s290 + $0x80] sm:$0xff] %v645
      %678 = vst [vmem:[%s290 + $0x88] sm:$0xff] %v646
      %679 = vst [vmem:[%s290 + $0x90] sm:$0xff] %v647
      %680 = vst [vmem:[%s290 + $0x98] sm:$0xff] %v648
      %681 = vst [vmem:[%s290 + $0xa0] sm:$0xff] %v649
      %682 = vst [vmem:[%s290 + $0xa8] sm:$0xff] %v650
      %683 = vst [vmem:[%s290 + $0xb0] sm:$0xff] %v651
      %684 = vst [vmem:[%s290 + $0xb8] sm:$0xff] %v652
      %685 = vst [vmem:[%s290 + $0xc0] sm:$0xff] %v653
      %686 = vst [vmem:[%s290 + $0xc8] sm:$0xff] %v654
      %687 = vst [vmem:[%s290 + $0xd0] sm:$0xff] %v655
      %688 = vst [vmem:[%s290 + $0xd8] sm:$0xff] %v656
      %689 = vst [vmem:[%s290 + $0xe0] sm:$0xff] %v657
      %690 = vst [vmem:[%s290 + $0xe8] sm:$0xff] %v658
      %691 = vst [vmem:[%s290 + $0xf0] sm:$0xff] %v659
      %692 = vst [vmem:[%s290 + $0xf8] sm:$0xff] %v660
      %s693 = smul.u32 16, %s20
      %s694 = smul.u32 2, %s21
      %p695 = scmp.lt.s32.totalorder %s19, 1
      %s696 = scalar_select %p695, %s19, 1
      %p697 = scmp.lt.s32.totalorder %s693, 15
      %s698 = scalar_select %p697, %s693, 15
      %p699 = scmp.lt.s32.totalorder %s694, 1
      %s700 = scalar_select %p699, %s694, 1
      %s701 = smul.addr %s698, 2
      %s702 = sadd.s32 %s700, %s701
      %s703 = smul.addr %s696, 32
      %s704 = sadd.s32 %s702, %s703
      %s705 = smul.addr %s704, 8
      %s706 = scalar_lea.vmem %s3, %s705
      // Predicated region
      $region33: #{cnn_block.3} parent=31 // pred_check
        %p707 = pneg %p137
      $region34: #{cnn_block.3} parent=31 // pred_check_branch
        %709 = sbr.rel (%p707) target = $region36
      $region35: #{cnn_block.3} parent=31 // pred_region
        %s710 = smul.u32 16, %s20
        %s711 = smul.u32 2, %s21
      $region36: #{cnn_block.3} parent=31 // pred_fallthru
        _
    $region32: #{cnn_block.3} parent=5 // pred_fallthru
      _
    %p712 = scmp.le.s32.totalorder 2, %s9
    // Predicated region
    $region37: #{cnn_block.3} parent=5 // pred_check
      %p713 = pneg %p712
    $region38: #{cnn_block.3} parent=5 // pred_check_branch
      %715 = sbr.rel (%p713) target = $region40
    $region39: #{cnn_block.3} parent=5 // pred_region
      %s716 = ssub.s32 %s9, 2
      // Predicated region
      $region41: #{cnn_block.3} parent=39 // pred_check
        %p717 = pneg %p143
      $region42: #{cnn_block.3} parent=39 // pred_check_branch
        %719 = sbr.rel (%p717) target = $region44
      $region43: #{cnn_block.3} parent=39 // pred_region
        %s720 = smul.u32 16, %s23
        %s721 = smul.u32 2, %s24
        %p722 = scmp.lt.s32.totalorder %s22, 1
        %s723 = scalar_select %p722, %s22, 1
        %p724 = scmp.lt.s32.totalorder %s720, 15
        %s725 = scalar_select %p724, %s720, 15
        %p726 = scmp.lt.s32.totalorder %s721, 1
        %s727 = scalar_select %p726, %s721, 1
        %s728 = smul.addr %s725, 2
        %s729 = sadd.s32 %s727, %s728
        %s730 = smul.addr %s723, 32
        %s731 = sadd.s32 %s729, %s730
        %s732 = smul.addr %s731, 8
        %s733 = scalar_lea.vmem %s3, %s732
      $region44: #{cnn_block.3} parent=39 // pred_fallthru
        _
    $region40: #{cnn_block.3} parent=5 // pred_fallthru
      _
  $region6: #{cnn_block.3} parent=0 // loop_footer
    %s13 = sadd.s32 1, %s9
  $region7: #{cnn_block.3} parent=0 // loop_footer_branch
    %8 = sbr.rel target = $region3
  $region8: #{cnn_block.3} parent=0 // loop_exit
    _

// kernel: cnn_block.2
$region0: #{cnn_block.2}
  #allocation0 [shape = 'u32[]', space=smem, size = 0x4, offset = 0x4, fixed_abs, tag = 'smem constant byte address 0x4 - core index']
  #allocation1 [shape = 'u32[144,128]{1,0:T(1,128)}', space=vmem, size = 0x12000, scoped, tag = 'internal scratch']
  %s0 = inlined_call_operand.vmem [shape: bf16[2,18,18,4], index: 0, kind: input, shape index: {}]
  %s1 = inlined_call_operand.vmem [shape: bf16[128,36], index: 1, kind: input, shape index: {}]
  %s2 = inlined_call_operand.vmem [shape: bf16[2,128,256], index: 2, kind: output, shape index: {0}]
  %s3 = inlined_call_operand.vmem [shape: f32[2,1,128,1], index: 3, kind: output, shape index: {1}]
  %s4 = inlined_call_operand.vmem [shape: f32[2,1,128,1], index: 4, kind: output, shape index: {2}]
  %5 = xla_tuple %s2, %s3, %s4
  %s6 = sld [smem:[#allocation0]]
  $region57: #{cnn_block.2} parent=0
    _
  %s8 = ssub.s32 1, %s6
  %s9 = scalar_select 0, %s8, %s6
  loop: start=0, step=1, limit=4
  $region2: #{cnn_block.2} parent=0 // loop_pre_header
    _
  $region3: #{cnn_block.2} parent=0 // loop_header
    %s11 = sphi 0, %s15
    %p12 = scmp.ge.s32.totalorder %s11, 4
    %s18 = sphi 0, %s37
    %s19 = sphi 0, %s33
    %s20 = sphi 0, %s29
    %s21 = sphi 0, %s18
    %s22 = sphi 0, %s19
    %s23 = sphi 0, %s20
    %s24 = sphi 0, %s21
    %s25 = sphi 0, %s22
    %s26 = sphi 0, %s23
    %s40 = sphi 0, %s42
    %s43 = sphi 0, %s40
    %s44 = sphi 0, %s43
    %s60 = sphi 0, %s44
    %s66 = sphi 0, %s68
    %s69 = sphi 0, %s66
    %s70 = sphi 0, %s69
    %s86 = sphi 0, %s70
    %s96 = sphi 0, %s98
    %s99 = sphi 0, %s96
    %s100 = sphi 0, %s99
    %s116 = sphi 0, %s100
    %s126 = sphi 0, %s128
    %s129 = sphi 0, %s126
    %s130 = sphi 0, %s129
    %s146 = sphi 0, %s130
    %s156 = sphi 0, %s158
    %s159 = sphi 0, %s156
    %s160 = sphi 0, %s159
    %s176 = sphi 0, %s160
  $region4: #{cnn_block.2} parent=0 // loop_header_branch
    %14 = sbr.rel (%p12) target = $region8
  $region5: #{cnn_block.2} parent=0 // loop_body
    %s16 = ssub.s32 %s11, 1
    %s17 = ssub.s32 %s11, 2
    %s27 = sadd.s32 1, %s20
    %p28 = scmp.ge.s32.totalorder %s27, 1
    %s29 = scalar_select %p28, 0, %s27
    %s30 = sadd.s32 1, %s19
    %s31 = scalar_select %p28, %s30, %s19
    %p32 = scmp.ge.s32.totalorder %s31, 1
    %s33 = scalar_select %p32, 0, %s31
    %s34 = sadd.s32 1, %s18
    %s35 = scalar_select %p32, %s34, %s18
    %p36 = scmp.ge.s32.totalorder %s35, 2
    %s37 = scalar_select %p36, 0, %s35
    %s38 = ssub.s32 %s18, %s37
    %p39 = scmp.eq.s32.totalorder %s38, 0
    %s41 = sadd.s32 %s40, 1
    %s42 = scalar_select %p39, %s40, %s41
    %p45 = pneg %p39
    %p46 = scmp.eq.s32.totalorder %s11, 1
    %p47 = por %p45, %p46
    %p48 = scmp.ne.s32.totalorder %s40, %s43
    %p49 = scmp.eq.s32.totalorder %s11, 0
    %p50 = por %p48, %p49
    %p51 = scmp.ne.s32.totalorder %s40, %s43
    %p52 = scmp.eq.s32.totalorder %s16, 1
    %p53 = por %p51, %p52
    %p54 = scmp.ne.s32.totalorder %s43, %s44
    %p55 = scmp.eq.s32.totalorder %s16, 0
    %p56 = por %p54, %p55
    %p57 = scmp.ne.s32.totalorder %s43, %s44
    %p58 = scmp.eq.s32.totalorder %s17, 1
    %p59 = por %p57, %p58
    %p61 = scmp.ne.s32.totalorder %s44, %s60
    %p62 = scmp.eq.s32.totalorder %s17, 0
    %p63 = por %p61, %p62
    %s64 = ssub.s32 %s19, %s33
    %p65 = scmp.eq.s32.totalorder %s64, 0
    %s67 = sadd.s32 %s66, 1
    %s68 = scalar_select %p65, %s66, %s67
    %p71 = pneg %p65
    %p72 = scmp.eq.s32.totalorder %s11, 1
    %p73 = por %p71, %p72
    %p74 = scmp.ne.s32.totalorder %s66, %s69
    %p75 = scmp.eq.s32.totalorder %s11, 0
    %p76 = por %p74, %p75
    %p77 = scmp.ne.s32.totalorder %s66, %s69
    %p78 = scmp.eq.s32.totalorder %s16, 1
    %p79 = por %p77, %p78
    %p80 = scmp.ne.s32.totalorder %s69, %s70
    %p81 = scmp.eq.s32.totalorder %s16, 0
    %p82 = por %p80, %p81
    %p83 = scmp.ne.s32.totalorder %s69, %s70
    %p84 = scmp.eq.s32.totalorder %s17, 1
    %p85 = por %p83, %p84
    %p87 = scmp.ne.s32.totalorder %s70, %s86
    %p88 = scmp.eq.s32.totalorder %s17, 0
    %p89 = por %p87, %p88
    %s90 = ssub.s32 %s18, %s37
    %s91 = ssub.s32 %s19, %s33
    %s92 = sor.u32 %s90, %s91
    %s93 = ssub.s32 %s20, %s29
    %s94 = sor.u32 %s92, %s93
    %p95 = scmp.eq.s32.totalorder %s94, 0
    %s97 = sadd.s32 %s96, 1
    %s98 = scalar_select %p95, %s96, %s97
    %p101 = pneg %p95
    %p102 = scmp.eq.s32.totalorder %s11, 1
    %p103 = por %p101, %p102
    %p104 = scmp.ne.s32.totalorder %s96, %s99
    %p105 = scmp.eq.s32.totalorder %s11, 0
    %p106 = por %p104, %p105
    %p107 = scmp.ne.s32.totalorder %s96, %s99
    %p108 = scmp.eq.s32.totalorder %s16, 1
    %p109 = por %p107, %p108
    %p110 = scmp.ne.s32.totalorder %s99, %s100
    %p111 = scmp.eq.s32.totalorder %s16, 0
    %p112 = por %p110, %p111
    %p113 = scmp.ne.s32.totalorder %s99, %s100
    %p114 = scmp.eq.s32.totalorder %s17, 1
    %p115 = por %p113, %p114
    %p117 = scmp.ne.s32.totalorder %s100, %s116
    %p118 = scmp.eq.s32.totalorder %s17, 0
    %p119 = por %p117, %p118
    %s120 = ssub.s32 %s18, %s37
    %s121 = ssub.s32 %s20, %s29
    %s122 = sor.u32 %s120, %s121
    %s123 = ssub.s32 %s19, %s33
    %s124 = sor.u32 %s122, %s123
    %p125 = scmp.eq.s32.totalorder %s124, 0
    %s127 = sadd.s32 %s126, 1
    %s128 = scalar_select %p125, %s126, %s127
    %p131 = pneg %p125
    %p132 = scmp.eq.s32.totalorder %s11, 1
    %p133 = por %p131, %p132
    %p134 = scmp.ne.s32.totalorder %s126, %s129
    %p135 = scmp.eq.s32.totalorder %s11, 0
    %p136 = por %p134, %p135
    %p137 = scmp.ne.s32.totalorder %s126, %s129
    %p138 = scmp.eq.s32.totalorder %s16, 1
    %p139 = por %p137, %p138
    %p140 = scmp.ne.s32.totalorder %s129, %s130
    %p141 = scmp.eq.s32.totalorder %s16, 0
    %p142 = por %p140, %p141
    %p143 = scmp.ne.s32.totalorder %s129, %s130
    %p144 = scmp.eq.s32.totalorder %s17, 1
    %p145 = por %p143, %p144
    %p147 = scmp.ne.s32.totalorder %s130, %s146
    %p148 = scmp.eq.s32.totalorder %s17, 0
    %p149 = por %p147, %p148
    %s150 = ssub.s32 %s18, %s37
    %s151 = ssub.s32 %s20, %s29
    %s152 = sor.u32 %s150, %s151
    %s153 = ssub.s32 %s19, %s33
    %s154 = sor.u32 %s152, %s153
    %p155 = scmp.eq.s32.totalorder %s154, 0
    %s157 = sadd.s32 %s156, 1
    %s158 = scalar_select %p155, %s156, %s157
    %p161 = pneg %p155
    %p162 = scmp.eq.s32.totalorder %s11, 1
    %p163 = por %p161, %p162
    %p164 = scmp.ne.s32.totalorder %s156, %s159
    %p165 = scmp.eq.s32.totalorder %s11, 0
    %p166 = por %p164, %p165
    %p167 = scmp.ne.s32.totalorder %s156, %s159
    %p168 = scmp.eq.s32.totalorder %s16, 1
    %p169 = por %p167, %p168
    %p170 = scmp.ne.s32.totalorder %s159, %s160
    %p171 = scmp.eq.s32.totalorder %s16, 0
    %p172 = por %p170, %p171
    %p173 = scmp.ne.s32.totalorder %s159, %s160
    %p174 = scmp.eq.s32.totalorder %s17, 1
    %p175 = por %p173, %p174
    %p177 = scmp.ne.s32.totalorder %s160, %s176
    %p178 = scmp.eq.s32.totalorder %s17, 0
    %p179 = por %p177, %p178
    %p180 = scmp.le.s32.totalorder 1, %s11
    %p181 = scmp.lt.s32.totalorder %s11, 3
    %p182 = pnand %p180, %p181
    %p183 = pneg %p182
    // Predicated region
    $region9: #{cnn_block.2} parent=5 // pred_check
      _
    $region10: #{cnn_block.2} parent=5 // pred_check_branch
      %185 = sbr.rel (%p182) target = $region12
    $region11: #{cnn_block.2} parent=5 // pred_region
      %s186 = ssub.s32 %s11, 1
      // Predicated region
      $region13: #{cnn_block.2} parent=11 // pred_check
        %p187 = pneg %p82
      $region14: #{cnn_block.2} parent=11 // pred_check_branch
        %189 = sbr.rel (%p187) target = $region16
      $region15: #{cnn_block.2} parent=11 // pred_region
        %s190 = smul.u32 16, %s22
        %p191 = scmp.lt.s32.totalorder %s190, 15
        %s192 = scalar_select %p191, %s190, 15
        %s193 = smul.addr %s192, 4
        %s194 = scalar_lea.vmem %s1, %s193
        %s195 = smul.u32 16, %s22
      $region16: #{cnn_block.2} parent=11 // pred_fallthru
        _
    $region12: #{cnn_block.2} parent=5 // pred_fallthru
      _
    %p196 = scmp.lt.s32.totalorder %s11, 2
    // Predicated region
    $region17: #{cnn_block.2} parent=5 // pred_check
      %p197 = pneg %p196
    $region18: #{cnn_block.2} parent=5 // pred_check_branch
      %199 = sbr.rel (%p197) target = $region20
    $region19: #{cnn_block.2} parent=5 // pred_region
      // Predicated region
      $region21: #{cnn_block.2} parent=19 // pred_check
        %p200 = pneg %p50
      $region22: #{cnn_block.2} parent=19 // pred_check_branch
        %202 = sbr.rel (%p200) target = $region24
      $region23: #{cnn_block.2} parent=19 // pred_region
        %p203 = scmp.lt.s32.totalorder %s18, 1
        %s204 = scalar_select %p203, %s18, 1
        %s205 = smul.addr %s204, 54
        %s206 = smul.addr %s205, 4
        %s207 = scalar_lea.vmem %s0, %s206
      $region24: #{cnn_block.2} parent=19 // pred_fallthru
        _
    $region20: #{cnn_block.2} parent=5 // pred_fallthru
      _
    %p208 = scmp.le.s32.totalorder 1, %s11
    %p209 = scmp.lt.s32.totalorder %s11, 3
    %p210 = pnand %p208, %p209
    %p211 = pneg %p210
    // Predicated region
    $region25: #{cnn_block.2} parent=5 // pred_check
      _
    $region26: #{cnn_block.2} parent=5 // pred_check_branch
      %213 = sbr.rel (%p210) target = $region28
    $region27: #{cnn_block.2} parent=5 // pred_region
      %s214 = ssub.s32 %s11, 1
      %p215 = scmp.lt.s32.totalorder %s21, 1
      %s216 = scalar_select %p215, %s21, 1
      %s217 = smul.addr %s216, 54
      %s218 = smul.addr %s217, 4
      %s219 = scalar_lea.vmem %s0, %s218
      %p220 = pneg %p56
      %p221 = pneg %p53
      %s222 = smul.u32 16, %s22
      %p223 = scmp.lt.s32.totalorder %s222, 15
      %s224 = scalar_select %p223, %s222, 15
      %s225 = smul.addr %s224, 4
      %s226 = scalar_lea.vmem %s1, %s225
      %p227 = pneg %p82
      %p228 = pneg %p79
      %p229 = pneg %p112
      %p230 = pneg %p109
      %s231 = smul.u32 16, %s22
      %s232 = smul.u32 2, %s23
      %p233 = scmp.lt.s32.totalorder %s21, 1
      %s234 = scalar_select %p233, %s21, 1
      %p235 = scmp.lt.s32.totalorder %s231, 15
      %s236 = scalar_select %p235, %s231, 15
      %p237 = scmp.lt.s32.totalorder %s232, 1
      %s238 = scalar_select %p237, %s232, 1
      %s239 = smul.addr %s236, 2
      %s240 = sadd.s32 %s238, %s239
      %s241 = smul.addr %s234, 32
      %s242 = sadd.s32 %s240, %s241
      %s243 = smul.addr %s242, 4
      %s244 = scalar_lea.vmem %s2, %s243
      %p245 = pneg %p142
      %p246 = pneg %p139
      %s247 = smul.u32 16, %s22
      %p248 = scmp.lt.s32.totalorder %s21, 1
      %s249 = scalar_select %p248, %s21, 1
      %p250 = scmp.lt.s32.totalorder %s23, 0
      %s251 = scalar_select %p250, %s23, 0
      %p252 = scmp.lt.s32.totalorder %s247, 15
      %s253 = scalar_select %p252, %s247, 15
      %s254 = smul.addr %s251, 16
      %s255 = sadd.s32 %s253, %s254
      %s256 = smul.addr %s249, 16
      %s257 = sadd.s32 %s255, %s256
      %s258 = smul.addr %s257, 8
      %s259 = scalar_lea.vmem %s3, %s258
      %p260 = pneg %p172
      %p261 = pneg %p169
      %s262 = smul.u32 16, %s22
      %p263 = scmp.lt.s32.totalorder %s21, 1
      %s264 = scalar_select %p263, %s21, 1
      %p265 = scmp.lt.s32.totalorder %s23, 0
      %s266 = scalar_select %p265, %s23, 0
      %p267 = scmp.lt.s32.totalorder %s262, 15
      %s268 = scalar_select %p267, %s262, 15
      %s269 = smul.addr %s266, 16
      %s270 = sadd.s32 %s268, %s269
      %s271 = smul.addr %s264, 16
      %s272 = sadd.s32 %s270, %s271
      %s273 = smul.addr %s272, 8
      %s274 = scalar_lea.vmem %s4, %s273
      %p275 = scmp.lt.s32.totalorder %s21, 1
      %s276 = scalar_select %p275, %s21, 1
      %s277 = smul.addr %s276, 54
      %s278 = smul.addr %s277, 4
      %s279 = scalar_lea.vmem %s0, %s278
      %s280 = smul.u32 16, %s22
      %p281 = scmp.lt.s32.totalorder %s280, 15
      %s282 = scalar_select %p281, %s280, 15
      %s283 = smul.addr %s282, 4
      %s284 = scalar_lea.vmem %s1, %s283
      %s285 = smul.u32 16, %s22
      %s286 = smul.u32 16, %s22
      %s287 = smul.u32 2, %s23
      %p288 = scmp.lt.s32.totalorder %s21, 1
      %s289 = scalar_select %p288, %s21, 1
      %p290 = scmp.lt.s32.totalorder %s286, 15
      %s291 = scalar_select %p290, %s286, 15
      %p292 = scmp.lt.s32.totalorder %s287, 1
      %s293 = scalar_select %p292, %s287, 1
      %s294 = smul.addr %s291, 2
      %s295 = sadd.s32 %s293, %s294
      %s296 = smul.addr %s289, 32
      %s297 = sadd.s32 %s295, %s296
      %s298 = smul.addr %s297, 4
      %s299 = scalar_lea.vmem %s2, %s298
      %s300 = smul.u32 16, %s22
      %s301 = smul.u32 2, %s23
      %s302 = smul.u32 16, %s22
      %p303 = scmp.lt.s32.totalorder %s21, 1
      %s304 = scalar_select %p303, %s21, 1
      %p305 = scmp.lt.s32.totalorder %s23, 0
      %s306 = scalar_select %p305, %s23, 0
      %p307 = scmp.lt.s32.totalorder %s302, 15
      %s308 = scalar_select %p307, %s302, 15
      %s309 = smul.addr %s306, 16
      %s310 = sadd.s32 %s308, %s309
      %s311 = smul.addr %s304, 16
      %s312 = sadd.s32 %s310, %s311
      %s313 = smul.addr %s312, 8
      %s314 = scalar_lea.vmem %s3, %s313
      %s315 = smul.u32 16, %s22
      %s316 = smul.u32 16, %s22
      %p317 = scmp.lt.s32.totalorder %s21, 1
      %s318 = scalar_select %p317, %s21, 1
      %p319 = scmp.lt.s32.totalorder %s23, 0
      %s320 = scalar_select %p319, %s23, 0
      %p321 = scmp.lt.s32.totalorder %s316, 15
      %s322 = scalar_select %p321, %s316, 15
      %s323 = smul.addr %s320, 16
      %s324 = sadd.s32 %s322, %s323
      %s325 = smul.addr %s318, 16
      %s326 = sadd.s32 %s324, %s325
      %s327 = smul.addr %s326, 8
      %s328 = scalar_lea.vmem %s4, %s327
      %s329 = smul.u32 16, %s22
      %s331 = smul.u32 %s23, 16
      %s332 = smul.u32 %s331, 3
      %s333 = smul.addr %s332, 4
      %s334 = scalar_lea.vmem %s279, %s333
      %v335 = vld [vmem:[%s334] sm:$0xf]
      %v336 = vld [vmem:[%s334 + $0x4] sm:$0xf]
      %v337 = vld [vmem:[%s334 + $0x8] sm:$0x1]
      %v338 = vld [vmem:[%s334 + $0xc] sm:$0xf]
      %v339 = vld [vmem:[%s334 + $0x10] sm:$0xf]
      %v340 = vld [vmem:[%s334 + $0x14] sm:$0x1]
      %v341 = vld [vmem:[%s334 + $0x18] sm:$0xf]
      %v342 = vld [vmem:[%s334 + $0x1c] sm:$0xf]
      %v343 = vld [vmem:[%s334 + $0x20] sm:$0x1]
      %v344 = vld [vmem:[%s334 + $0x24] sm:$0xf]
      %v345 = vld [vmem:[%s334 + $0x28] sm:$0xf]
      %v346 = vld [vmem:[%s334 + $0x2c] sm:$0x1]
      %v347 = vld [vmem:[%s334 + $0x30] sm:$0xf]
      %v348 = vld [vmem:[%s334 + $0x34] sm:$0xf]
      %v349 = vld [vmem:[%s334 + $0x38] sm:$0x1]
      %v350 = vld [vmem:[%s334 + $0x3c] sm:$0xf]
      %v351 = vld [vmem:[%s334 + $0x40] sm:$0xf]
      %v352 = vld [vmem:[%s334 + $0x44] sm:$0x1]
      %v353 = vld [vmem:[%s334 + $0x48] sm:$0xf]
      %v354 = vld [vmem:[%s334 + $0x4c] sm:$0xf]
      %v355 = vld [vmem:[%s334 + $0x50] sm:$0x1]
      %v356 = vld [vmem:[%s334 + $0x54] sm:$0xf]
      %v357 = vld [vmem:[%s334 + $0x58] sm:$0xf]
      %v358 = vld [vmem:[%s334 + $0x5c] sm:$0x1]
      %v359 = vld [vmem:[%s334 + $0x60] sm:$0xf]
      %v360 = vld [vmem:[%s334 + $0x64] sm:$0xf]
      %v361 = vld [vmem:[%s334 + $0x68] sm:$0x1]
      %v362 = vld [vmem:[%s334 + $0x6c] sm:$0xf]
      %v363 = vld [vmem:[%s334 + $0x70] sm:$0xf]
      %v364 = vld [vmem:[%s334 + $0x74] sm:$0x1]
      %v365 = vld [vmem:[%s334 + $0x78] sm:$0xf]
      %v366 = vld [vmem:[%s334 + $0x7c] sm:$0xf]
      %v367 = vld [vmem:[%s334 + $0x80] sm:$0x1]
      %v368 = vld [vmem:[%s334 + $0x84] sm:$0xf]
      %v369 = vld [vmem:[%s334 + $0x88] sm:$0xf]
      %v370 = vld [vmem:[%s334 + $0x8c] sm:$0x1]
      %v371 = vld [vmem:[%s334 + $0x90] sm:$0xf]
      %v372 = vld [vmem:[%s334 + $0x94] sm:$0xf]
      %v373 = vld [vmem:[%s334 + $0x98] sm:$0x1]
      %v374 = vld [vmem:[%s334 + $0x9c] sm:$0xf]
      %v375 = vld [vmem:[%s334 + $0xa0] sm:$0xf]
      %v376 = vld [vmem:[%s334 + $0xa4] sm:$0x1]
      %v377 = vld [vmem:[%s334 + $0xa8] sm:$0xf]
      %v378 = vld [vmem:[%s334 + $0xac] sm:$0xf]
      %v379 = vld [vmem:[%s334 + $0xb0] sm:$0x1]
      %v380 = vld [vmem:[%s334 + $0xb4] sm:$0xf]
      %v381 = vld [vmem:[%s334 + $0xb8] sm:$0xf]
      %v382 = vld [vmem:[%s334 + $0xbc] sm:$0x1]
      %v383 = vld [vmem:[%s334 + $0xc0] sm:$0xf]
      %v384 = vld [vmem:[%s334 + $0xc4] sm:$0xf]
      %v385 = vld [vmem:[%s334 + $0xc8] sm:$0x1]
      %v386 = vld [vmem:[%s334 + $0xcc] sm:$0xf]
      %v387 = vld [vmem:[%s334 + $0xd0] sm:$0xf]
      %v388 = vld [vmem:[%s334 + $0xd4] sm:$0x1]
      %v421 = vunpack.c.l.b16 %v335
      %v422 = vunpack.c.l.b16 %v336
      %v423 = vunpack.c.l.b16 %v338
      %v424 = vunpack.c.l.b16 %v339
      %v425 = vunpack.c.l.b16 %v341
      %v426 = vunpack.c.l.b16 %v342
      %v427 = vunpack.c.l.b16 %v344
      %v428 = vunpack.c.l.b16 %v345
      %v429 = vunpack.c.l.b16 %v347
      %v430 = vunpack.c.l.b16 %v348
      %v431 = vunpack.c.l.b16 %v350
      %v432 = vunpack.c.l.b16 %v351
      %v433 = vunpack.c.l.b16 %v353
      %v434 = vunpack.c.l.b16 %v354
      %v435 = vunpack.c.l.b16 %v356
      %v436 = vunpack.c.l.b16 %v357
      %v437 = vunpack.c.l.b16 %v359
      %v438 = vunpack.c.l.b16 %v360
      %v439 = vunpack.c.l.b16 %v362
      %v440 = vunpack.c.l.b16 %v363
      %v441 = vunpack.c.l.b16 %v365
      %v442 = vunpack.c.l.b16 %v366
      %v443 = vunpack.c.l.b16 %v368
      %v444 = vunpack.c.l.b16 %v369
      %v445 = vunpack.c.l.b16 %v371
      %v446 = vunpack.c.l.b16 %v372
      %v447 = vunpack.c.l.b16 %v374
      %v448 = vunpack.c.l.b16 %v375
      %v449 = vunpack.c.l.b16 %v377
      %v450 = vunpack.c.l.b16 %v378
      %v451 = vunpack.c.l.b16 %v380
      %v452 = vunpack.c.l.b16 %v381
      %v453 = vpack.c.b16 %v422, %v421
      %v454 = vpack.c.b16 %v424, %v423
      %v455 = vpack.c.b16 %v426, %v425
      %v456 = vpack.c.b16 %v428, %v427
      %v457 = vpack.c.b16 %v430, %v429
      %v458 = vpack.c.b16 %v432, %v431
      %v459 = vpack.c.b16 %v434, %v433
      %v460 = vpack.c.b16 %v436, %v435
      %v461 = vpack.c.b16 %v438, %v437
      %v462 = vpack.c.b16 %v440, %v439
      %v463 = vpack.c.b16 %v442, %v441
      %v464 = vpack.c.b16 %v444, %v443
      %v465 = vpack.c.b16 %v446, %v445
      %v466 = vpack.c.b16 %v448, %v447
      %v467 = vpack.c.b16 %v450, %v449
      %v468 = vpack.c.b16 %v452, %v451
      %v485 = vunpack.c.l.b16 %v337
      %v486 = vunpack.c.l.b16 %v340
      %v487 = vunpack.c.l.b16 %v343
      %v488 = vunpack.c.l.b16 %v346
      %v489 = vunpack.c.l.b16 %v349
      %v490 = vunpack.c.l.b16 %v352
      %v491 = vunpack.c.l.b16 %v355
      %v492 = vunpack.c.l.b16 %v358
      %v493 = vunpack.c.l.b16 %v361
      %v494 = vunpack.c.l.b16 %v364
      %v495 = vunpack.c.l.b16 %v367
      %v496 = vunpack.c.l.b16 %v370
      %v497 = vunpack.c.l.b16 %v373
      %v498 = vunpack.c.l.b16 %v376
      %v499 = vunpack.c.l.b16 %v379
      %v500 = vunpack.c.l.b16 %v382
      %v501 = vpack.c.b16 %v485, %v485
      %v502 = vpack.c.b16 %v486, %v486
      %v503 = vpack.c.b16 %v487, %v487
      %v504 = vpack.c.b16 %v488, %v488
      %v505 = vpack.c.b16 %v489, %v489
      %v506 = vpack.c.b16 %v490, %v490
      %v507 = vpack.c.b16 %v491, %v491
      %v508 = vpack.c.b16 %v492, %v492
      %v509 = vpack.c.b16 %v493, %v493
      %v510 = vpack.c.b16 %v494, %v494
      %v511 = vpack.c.b16 %v495, %v495
      %v512 = vpack.c.b16 %v496, %v496
      %v513 = vpack.c.b16 %v497, %v497
      %v514 = vpack.c.b16 %v498, %v498
      %v515 = vpack.c.b16 %v499, %v499
      %v516 = vpack.c.b16 %v500, %v500
      %vm517 = vsmask.f32 7424
      %v519 = vshrl.u32 %v453, 16
      %v521 = vshll.u32 %v453, 16
      %v523 = vrot.slane %v521, 1
      %v524 = vor.u32 %v519, %v523
      %v526 = vshll.u32 %v501, 16
      %v528 = vrot.slane %v526, 1
      %v529 = vsel %vm517, %v524, %v528
      %v531 = vshrl.u32 %v454, 16
      %v533 = vshll.u32 %v454, 16
      %v535 = vrot.slane %v533, 1
      %v536 = vor.u32 %v531, %v535
      %v538 = vshll.u32 %v502, 16
      %v540 = vrot.slane %v538, 1
      %v541 = vsel %vm517, %v536, %v540
      %v543 = vshrl.u32 %v455, 16
      %v545 = vshll.u32 %v455, 16
      %v547 = vrot.slane %v545, 1
      %v548 = vor.u32 %v543, %v547
      %v550 = vshll.u32 %v503, 16
      %v552 = vrot.slane %v550, 1
      %v553 = vsel %vm517, %v548, %v552
      %v555 = vshrl.u32 %v456, 16
      %v557 = vshll.u32 %v456, 16
      %v559 = vrot.slane %v557, 1
      %v560 = vor.u32 %v555, %v559
      %v562 = vshll.u32 %v504, 16
      %v564 = vrot.slane %v562, 1
      %v565 = vsel %vm517, %v560, %v564
      %v567 = vshrl.u32 %v457, 16
      %v569 = vshll.u32 %v457, 16
      %v571 = vrot.slane %v569, 1
      %v572 = vor.u32 %v567, %v571
      %v574 = vshll.u32 %v505, 16
      %v576 = vrot.slane %v574, 1
      %v577 = vsel %vm517, %v572, %v576
      %v579 = vshrl.u32 %v458, 16
      %v581 = vshll.u32 %v458, 16
      %v583 = vrot.slane %v581, 1
      %v584 = vor.u32 %v579, %v583
      %v586 = vshll.u32 %v506, 16
      %v588 = vrot.slane %v586, 1
      %v589 = vsel %vm517, %v584, %v588
      %v591 = vshrl.u32 %v459, 16
      %v593 = vshll.u32 %v459, 16
      %v595 = vrot.slane %v593, 1
      %v596 = vor.u32 %v591, %v595
      %v598 = vshll.u32 %v507, 16
      %v600 = vrot.slane %v598, 1
      %v601 = vsel %vm517, %v596, %v600
      %v603 = vshrl.u32 %v460, 16
      %v605 = vshll.u32 %v460, 16
      %v607 = vrot.slane %v605, 1
      %v608 = vor.u32 %v603, %v607
      %v610 = vshll.u32 %v508, 16
      %v612 = vrot.slane %v610, 1
      %v613 = vsel %vm517, %v608, %v612
      %v615 = vshrl.u32 %v461, 16
      %v617 = vshll.u32 %v461, 16
      %v619 = vrot.slane %v617, 1
      %v620 = vor.u32 %v615, %v619
      %v622 = vshll.u32 %v509, 16
      %v624 = vrot.slane %v622, 1
      %v625 = vsel %vm517, %v620, %v624
      %v627 = vshrl.u32 %v462, 16
      %v629 = vshll.u32 %v462, 16
      %v631 = vrot.slane %v629, 1
      %v632 = vor.u32 %v627, %v631
      %v634 = vshll.u32 %v510, 16
      %v636 = vrot.slane %v634, 1
      %v637 = vsel %vm517, %v632, %v636
      %v639 = vshrl.u32 %v463, 16
      %v641 = vshll.u32 %v463, 16
      %v643 = vrot.slane %v641, 1
      %v644 = vor.u32 %v639, %v643
      %v646 = vshll.u32 %v511, 16
      %v648 = vrot.slane %v646, 1
      %v649 = vsel %vm517, %v644, %v648
      %v651 = vshrl.u32 %v464, 16
      %v653 = vshll.u32 %v464, 16
      %v655 = vrot.slane %v653, 1
      %v656 = vor.u32 %v651, %v655
      %v658 = vshll.u32 %v512, 16
      %v660 = vrot.slane %v658, 1
      %v661 = vsel %vm517, %v656, %v660
      %v663 = vshrl.u32 %v465, 16
      %v665 = vshll.u32 %v465, 16
      %v667 = vrot.slane %v665, 1
      %v668 = vor.u32 %v663, %v667
      %v670 = vshll.u32 %v513, 16
      %v672 = vrot.slane %v670, 1
      %v673 = vsel %vm517, %v668, %v672
      %v675 = vshrl.u32 %v466, 16
      %v677 = vshll.u32 %v466, 16
      %v679 = vrot.slane %v677, 1
      %v680 = vor.u32 %v675, %v679
      %v682 = vshll.u32 %v514, 16
      %v684 = vrot.slane %v682, 1
      %v685 = vsel %vm517, %v680, %v684
      %v687 = vshrl.u32 %v467, 16
      %v689 = vshll.u32 %v467, 16
      %v691 = vrot.slane %v689, 1
      %v692 = vor.u32 %v687, %v691
      %v694 = vshll.u32 %v515, 16
      %v696 = vrot.slane %v694, 1
      %v697 = vsel %vm517, %v692, %v696
      %v699 = vshrl.u32 %v468, 16
      %v701 = vshll.u32 %v468, 16
      %v703 = vrot.slane %v701, 1
      %v704 = vor.u32 %v699, %v703
      %v706 = vshll.u32 %v516, 16
      %v708 = vrot.slane %v706, 1
      %v709 = vsel %vm517, %v704, %v708
      %710 = vrot.lane.b32.xlu0 %v529, 4
      %v711 = vpop.permute.xlu0 %710
      %712 = vrot.lane.b32.xlu0 %v541, 4
      %v713 = vpop.permute.xlu0 %712
      %714 = vrot.lane.b32.xlu0 %v553, 4
      %v715 = vpop.permute.xlu0 %714
      %716 = vrot.lane.b32.xlu0 %v565, 4
      %v717 = vpop.permute.xlu0 %716
      %718 = vrot.lane.b32.xlu0 %v577, 4
      %v719 = vpop.permute.xlu0 %718
      %720 = vrot.lane.b32.xlu0 %v589, 4
      %v721 = vpop.permute.xlu0 %720
      %722 = vrot.lane.b32.xlu0 %v601, 4
      %v723 = vpop.permute.xlu0 %722
      %724 = vrot.lane.b32.xlu0 %v613, 4
      %v725 = vpop.permute.xlu0 %724
      %726 = vrot.lane.b32.xlu0 %v625, 4
      %v727 = vpop.permute.xlu0 %726
      %728 = vrot.lane.b32.xlu0 %v637, 4
      %v729 = vpop.permute.xlu0 %728
      %730 = vrot.lane.b32.xlu0 %v649, 4
      %v731 = vpop.permute.xlu0 %730
      %732 = vrot.lane.b32.xlu0 %v661, 4
      %v733 = vpop.permute.xlu0 %732
      %734 = vrot.lane.b32.xlu0 %v673, 4
      %v735 = vpop.permute.xlu0 %734
      %736 = vrot.lane.b32.xlu0 %v685, 4
      %v737 = vpop.permute.xlu0 %736
      %738 = vrot.lane.b32.xlu0 %v697, 4
      %v739 = vpop.permute.xlu0 %738
      %740 = vrot.lane.b32.xlu0 %v709, 4
      %v741 = vpop.permute.xlu0 %740
      %vm742 = vcmask 1046528
      %v743 = vrot.slane %v453, 1
      %v744 = vrot.slane %v501, 1
      %v745 = vsel %vm742, %v743, %v744
      %v746 = vrot.slane %v454, 1
      %v747 = vrot.slane %v502, 1
      %v748 = vsel %vm742, %v746, %v747
      %v749 = vrot.slane %v455, 1
      %v750 = vrot.slane %v503, 1
      %v751 = vsel %vm742, %v749, %v750
      %v752 = vrot.slane %v456, 1
      %v753 = vrot.slane %v504, 1
      %v754 = vsel %vm742, %v752, %v753
      %v755 = vrot.slane %v457, 1
      %v756 = vrot.slane %v505, 1
      %v757 = vsel %vm742, %v755, %v756
      %v758 = vrot.slane %v458, 1
      %v759 = vrot.slane %v506, 1
      %v760 = vsel %vm742, %v758, %v759
      %v761 = vrot.slane %v459, 1
      %v762 = vrot.slane %v507, 1
      %v763 = vsel %vm742, %v761, %v762
      %v764 = vrot.slane %v460, 1
      %v765 = vrot.slane %v508, 1
      %v766 = vsel %vm742, %v764, %v765
      %v767 = vrot.slane %v461, 1
      %v768 = vrot.slane %v509, 1
      %v769 = vsel %vm742, %v767, %v768
      %v770 = vrot.slane %v462, 1
      %v771 = vrot.slane %v510, 1
      %v772 = vsel %vm742, %v770, %v771
      %v773 = vrot.slane %v463, 1
      %v774 = vrot.slane %v511, 1
      %v775 = vsel %vm742, %v773, %v774
      %v776 = vrot.slane %v464, 1
      %v777 = vrot.slane %v512, 1
      %v778 = vsel %vm742, %v776, %v777
      %v779 = vrot.slane %v465, 1
      %v780 = vrot.slane %v513, 1
      %v781 = vsel %vm742, %v779, %v780
      %v782 = vrot.slane %v466, 1
      %v783 = vrot.slane %v514, 1
      %v784 = vsel %vm742, %v782, %v783
      %v785 = vrot.slane %v467, 1
      %v786 = vrot.slane %v515, 1
      %v787 = vsel %vm742, %v785, %v786
      %v788 = vrot.slane %v468, 1
      %v789 = vrot.slane %v516, 1
      %v790 = vsel %vm742, %v788, %v789
      %791 = vrot.lane.b32.xlu0 %v745, 8
      %v792 = vpop.permute.xlu0 %791
      %793 = vrot.lane.b32.xlu0 %v748, 8
      %v794 = vpop.permute.xlu0 %793
      %795 = vrot.lane.b32.xlu0 %v751, 8
      %v796 = vpop.permute.xlu0 %795
      %797 = vrot.lane.b32.xlu0 %v754, 8
      %v798 = vpop.permute.xlu0 %797
      %799 = vrot.lane.b32.xlu0 %v757, 8
      %v800 = vpop.permute.xlu0 %799
      %801 = vrot.lane.b32.xlu0 %v760, 8
      %v802 = vpop.permute.xlu0 %801
      %803 = vrot.lane.b32.xlu0 %v763, 8
      %v804 = vpop.permute.xlu0 %803
      %805 = vrot.lane.b32.xlu0 %v766, 8
      %v806 = vpop.permute.xlu0 %805
      %807 = vrot.lane.b32.xlu0 %v769, 8
      %v808 = vpop.permute.xlu0 %807
      %809 = vrot.lane.b32.xlu0 %v772, 8
      %v810 = vpop.permute.xlu0 %809
      %811 = vrot.lane.b32.xlu0 %v775, 8
      %v812 = vpop.permute.xlu0 %811
      %813 = vrot.lane.b32.xlu0 %v778, 8
      %v814 = vpop.permute.xlu0 %813
      %815 = vrot.lane.b32.xlu0 %v781, 8
      %v816 = vpop.permute.xlu0 %815
      %817 = vrot.lane.b32.xlu0 %v784, 8
      %v818 = vpop.permute.xlu0 %817
      %819 = vrot.lane.b32.xlu0 %v787, 8
      %v820 = vpop.permute.xlu0 %819
      %821 = vrot.lane.b32.xlu0 %v790, 8
      %v822 = vpop.permute.xlu0 %821
      %v825 = vunpack.c.l.b16 %v383
      %v826 = vunpack.c.l.b16 %v384
      %v827 = vpack.c.b16 %v826, %v825
      %828 = vrot.lane.b32.xlu0 %v454, 12
      %v829 = vpop.permute.xlu0 %828
      %830 = vrot.lane.b32.xlu0 %v455, 12
      %v831 = vpop.permute.xlu0 %830
      %832 = vrot.lane.b32.xlu0 %v456, 12
      %v833 = vpop.permute.xlu0 %832
      %834 = vrot.lane.b32.xlu0 %v457, 12
      %v835 = vpop.permute.xlu0 %834
      %836 = vrot.lane.b32.xlu0 %v458, 12
      %v837 = vpop.permute.xlu0 %836
      %838 = vrot.lane.b32.xlu0 %v459, 12
      %v839 = vpop.permute.xlu0 %838
      %840 = vrot.lane.b32.xlu0 %v460, 12
      %v841 = vpop.permute.xlu0 %840
      %842 = vrot.lane.b32.xlu0 %v461, 12
      %v843 = vpop.permute.xlu0 %842
      %844 = vrot.lane.b32.xlu0 %v462, 12
      %v845 = vpop.permute.xlu0 %844
      %846 = vrot.lane.b32.xlu0 %v463, 12
      %v847 = vpop.permute.xlu0 %846
      %848 = vrot.lane.b32.xlu0 %v464, 12
      %v849 = vpop.permute.xlu0 %848
      %850 = vrot.lane.b32.xlu0 %v465, 12
      %v851 = vpop.permute.xlu0 %850
      %852 = vrot.lane.b32.xlu0 %v466, 12
      %v853 = vpop.permute.xlu0 %852
      %854 = vrot.lane.b32.xlu0 %v467, 12
      %v855 = vpop.permute.xlu0 %854
      %856 = vrot.lane.b32.xlu0 %v468, 12
      %v857 = vpop.permute.xlu0 %856
      %858 = vrot.lane.b32.xlu0 %v827, 12
      %v859 = vpop.permute.xlu0 %858
      %v861 = vunpack.c.l.b16 %v385
      %v862 = vpack.c.b16 %v861, %v861
      %v864 = vshrl.u32 %v827, 16
      %v866 = vshll.u32 %v827, 16
      %v868 = vrot.slane %v866, 1
      %v869 = vor.u32 %v864, %v868
      %v871 = vshll.u32 %v862, 16
      %v873 = vrot.slane %v871, 1
      %v874 = vsel %vm517, %v869, %v873
      %875 = vrot.lane.b32.xlu0 %v541, 16
      %v876 = vpop.permute.xlu0 %875
      %877 = vrot.lane.b32.xlu0 %v553, 16
      %v878 = vpop.permute.xlu0 %877
      %879 = vrot.lane.b32.xlu0 %v565, 16
      %v880 = vpop.permute.xlu0 %879
      %881 = vrot.lane.b32.xlu0 %v577, 16
      %v882 = vpop.permute.xlu0 %881
      %883 = vrot.lane.b32.xlu0 %v589, 16
      %v884 = vpop.permute.xlu0 %883
      %885 = vrot.lane.b32.xlu0 %v601, 16
      %v886 = vpop.permute.xlu0 %885
      %887 = vrot.lane.b32.xlu0 %v613, 16
      %v888 = vpop.permute.xlu0 %887
      %889 = vrot.lane.b32.xlu0 %v625, 16
      %v890 = vpop.permute.xlu0 %889
      %891 = vrot.lane.b32.xlu0 %v637, 16
      %v892 = vpop.permute.xlu0 %891
      %893 = vrot.lane.b32.xlu0 %v649, 16
      %v894 = vpop.permute.xlu0 %893
      %895 = vrot.lane.b32.xlu0 %v661, 16
      %v896 = vpop.permute.xlu0 %895
      %897 = vrot.lane.b32.xlu0 %v673, 16
      %v898 = vpop.permute.xlu0 %897
      %899 = vrot.lane.b32.xlu0 %v685, 16
      %v900 = vpop.permute.xlu0 %899
      %901 = vrot.lane.b32.xlu0 %v697, 16
      %v902 = vpop.permute.xlu0 %901
      %903 = vrot.lane.b32.xlu0 %v709, 16
      %v904 = vpop.permute.xlu0 %903
      %905 = vrot.lane.b32.xlu0 %v874, 16
      %v906 = vpop.permute.xlu0 %905
      %v907 = vrot.slane %v827, 1
      %v908 = vrot.slane %v862, 1
      %v909 = vsel %vm742, %v907, %v908
      %910 = vrot.lane.b32.xlu0 %v748, 20
      %v911 = vpop.permute.xlu0 %910
      %912 = vrot.lane.b32.xlu0 %v751, 20
      %v913 = vpop.permute.xlu0 %912
      %914 = vrot.lane.b32.xlu0 %v754, 20
      %v915 = vpop.permute.xlu0 %914
      %916 = vrot.lane.b32.xlu0 %v757, 20
      %v917 = vpop.permute.xlu0 %916
      %918 = vrot.lane.b32.xlu0 %v760, 20
      %v919 = vpop.permute.xlu0 %918
      %920 = vrot.lane.b32.xlu0 %v763, 20
      %v921 = vpop.permute.xlu0 %920
      %922 = vrot.lane.b32.xlu0 %v766, 20
      %v923 = vpop.permute.xlu0 %922
      %924 = vrot.lane.b32.xlu0 %v769, 20
      %v925 = vpop.permute.xlu0 %924
      %926 = vrot.lane.b32.xlu0 %v772, 20
      %v927 = vpop.permute.xlu0 %926
      %928 = vrot.lane.b32.xlu0 %v775, 20
      %v929 = vpop.permute.xlu0 %928
      %930 = vrot.lane.b32.xlu0 %v778, 20
      %v931 = vpop.permute.xlu0 %930
      %932 = vrot.lane.b32.xlu0 %v781, 20
      %v933 = vpop.permute.xlu0 %932
      %934 = vrot.lane.b32.xlu0 %v784, 20
      %v935 = vpop.permute.xlu0 %934
      %936 = vrot.lane.b32.xlu0 %v787, 20
      %v937 = vpop.permute.xlu0 %936
      %938 = vrot.lane.b32.xlu0 %v790, 20
      %v939 = vpop.permute.xlu0 %938
      %940 = vrot.lane.b32.xlu0 %v909, 20
      %v941 = vpop.permute.xlu0 %940
      %v944 = vunpack.c.l.b16 %v386
      %v945 = vunpack.c.l.b16 %v387
      %v946 = vpack.c.b16 %v945, %v944
      %947 = vrot.lane.b32.xlu0 %v455, 24
      %v948 = vpop.permute.xlu0 %947
      %949 = vrot.lane.b32.xlu0 %v456, 24
      %v950 = vpop.permute.xlu0 %949
      %951 = vrot.lane.b32.xlu0 %v457, 24
      %v952 = vpop.permute.xlu0 %951
      %953 = vrot.lane.b32.xlu0 %v458, 24
      %v954 = vpop.permute.xlu0 %953
      %955 = vrot.lane.b32.xlu0 %v459, 24
      %v956 = vpop.permute.xlu0 %955
      %957 = vrot.lane.b32.xlu0 %v460, 24
      %v958 = vpop.permute.xlu0 %957
      %959 = vrot.lane.b32.xlu0 %v461, 24
      %v960 = vpop.permute.xlu0 %959
      %961 = vrot.lane.b32.xlu0 %v462, 24
      %v962 = vpop.permute.xlu0 %961
      %963 = vrot.lane.b32.xlu0 %v463, 24
      %v964 = vpop.permute.xlu0 %963
      %965 = vrot.lane.b32.xlu0 %v464, 24
      %v966 = vpop.permute.xlu0 %965
      %967 = vrot.lane.b32.xlu0 %v465, 24
      %v968 = vpop.permute.xlu0 %967
      %969 = vrot.lane.b32.xlu0 %v466, 24
      %v970 = vpop.permute.xlu0 %969
      %971 = vrot.lane.b32.xlu0 %v467, 24
      %v972 = vpop.permute.xlu0 %971
      %973 = vrot.lane.b32.xlu0 %v468, 24
      %v974 = vpop.permute.xlu0 %973
      %975 = vrot.lane.b32.xlu0 %v827, 24
      %v976 = vpop.permute.xlu0 %975
      %977 = vrot.lane.b32.xlu0 %v946, 24
      %v978 = vpop.permute.xlu0 %977
      %v980 = vunpack.c.l.b16 %v388
      %v981 = vpack.c.b16 %v980, %v980
      %v983 = vshrl.u32 %v946, 16
      %v985 = vshll.u32 %v946, 16
      %v987 = vrot.slane %v985, 1
      %v988 = vor.u32 %v983, %v987
      %v990 = vshll.u32 %v981, 16
      %v992 = vrot.slane %v990, 1
      %v993 = vsel %vm517, %v988, %v992
      %994 = vrot.lane.b32.xlu0 %v553, 28
      %v995 = vpop.permute.xlu0 %994
      %996 = vrot.lane.b32.xlu0 %v565, 28
      %v997 = vpop.permute.xlu0 %996
      %998 = vrot.lane.b32.xlu0 %v577, 28
      %v999 = vpop.permute.xlu0 %998
      %1000 = vrot.lane.b32.xlu0 %v589, 28
      %v1001 = vpop.permute.xlu0 %1000
      %1002 = vrot.lane.b32.xlu0 %v601, 28
      %v1003 = vpop.permute.xlu0 %1002
      %1004 = vrot.lane.b32.xlu0 %v613, 28
      %v1005 = vpop.permute.xlu0 %1004
      %1006 = vrot.lane.b32.xlu0 %v625, 28
      %v1007 = vpop.permute.xlu0 %1006
      %1008 = vrot.lane.b32.xlu0 %v637, 28
      %v1009 = vpop.permute.xlu0 %1008
      %1010 = vrot.lane.b32.xlu0 %v649, 28
      %v1011 = vpop.permute.xlu0 %1010
      %1012 = vrot.lane.b32.xlu0 %v661, 28
      %v1013 = vpop.permute.xlu0 %1012
      %1014 = vrot.lane.b32.xlu0 %v673, 28
      %v1015 = vpop.permute.xlu0 %1014
      %1016 = vrot.lane.b32.xlu0 %v685, 28
      %v1017 = vpop.permute.xlu0 %1016
      %1018 = vrot.lane.b32.xlu0 %v697, 28
      %v1019 = vpop.permute.xlu0 %1018
      %1020 = vrot.lane.b32.xlu0 %v709, 28
      %v1021 = vpop.permute.xlu0 %1020
      %1022 = vrot.lane.b32.xlu0 %v874, 28
      %v1023 = vpop.permute.xlu0 %1022
      %1024 = vrot.lane.b32.xlu0 %v993, 28
      %v1025 = vpop.permute.xlu0 %1024
      %v1026 = vrot.slane %v946, 1
      %v1027 = vrot.slane %v981, 1
      %v1028 = vsel %vm742, %v1026, %v1027
      %1029 = vrot.lane.b32.xlu0 %v751, 32
      %v1030 = vpop.permute.xlu0 %1029
      %1031 = vrot.lane.b32.xlu0 %v754, 32
      %v1032 = vpop.permute.xlu0 %1031
      %1033 = vrot.lane.b32.xlu0 %v757, 32
      %v1034 = vpop.permute.xlu0 %1033
      %1035 = vrot.lane.b32.xlu0 %v760, 32
      %v1036 = vpop.permute.xlu0 %1035
      %1037 = vrot.lane.b32.xlu0 %v763, 32
      %v1038 = vpop.permute.xlu0 %1037
      %1039 = vrot.lane.b32.xlu0 %v766, 32
      %v1040 = vpop.permute.xlu0 %1039
      %1041 = vrot.lane.b32.xlu0 %v769, 32
      %v1042 = vpop.permute.xlu0 %1041
      %1043 = vrot.lane.b32.xlu0 %v772, 32
      %v1044 = vpop.permute.xlu0 %1043
      %1045 = vrot.lane.b32.xlu0 %v775, 32
      %v1046 = vpop.permute.xlu0 %1045
      %1047 = vrot.lane.b32.xlu0 %v778, 32
      %v1048 = vpop.permute.xlu0 %1047
      %1049 = vrot.lane.b32.xlu0 %v781, 32
      %v1050 = vpop.permute.xlu0 %1049
      %1051 = vrot.lane.b32.xlu0 %v784, 32
      %v1052 = vpop.permute.xlu0 %1051
      %1053 = vrot.lane.b32.xlu0 %v787, 32
      %v1054 = vpop.permute.xlu0 %1053
      %1055 = vrot.lane.b32.xlu0 %v790, 32
      %v1056 = vpop.permute.xlu0 %1055
      %1057 = vrot.lane.b32.xlu0 %v909, 32
      %v1058 = vpop.permute.xlu0 %1057
      %1059 = vrot.lane.b32.xlu0 %v1028, 32
      %v1060 = vpop.permute.xlu0 %1059
      %vm1061 = vcmask 31744
      %v1063 = vsel %vm1061, %v453, %v711
      %v1065 = vsel %vm1061, %v454, %v713
      %v1067 = vsel %vm1061, %v455, %v715
      %v1069 = vsel %vm1061, %v456, %v717
      %v1071 = vsel %vm1061, %v457, %v719
      %v1073 = vsel %vm1061, %v458, %v721
      %v1075 = vsel %vm1061, %v459, %v723
      %v1077 = vsel %vm1061, %v460, %v725
      %v1079 = vsel %vm1061, %v461, %v727
      %v1081 = vsel %vm1061, %v462, %v729
      %v1083 = vsel %vm1061, %v463, %v731
      %v1085 = vsel %vm1061, %v464, %v733
      %v1087 = vsel %vm1061, %v465, %v735
      %v1089 = vsel %vm1061, %v466, %v737
      %v1091 = vsel %vm1061, %v467, %v739
      %v1093 = vsel %vm1061, %v468, %v741
      %vm1094 = vcmask 64512
      %v1096 = vsel %vm1094, %v1063, %v792
      %v1098 = vsel %vm1094, %v1065, %v794
      %v1100 = vsel %vm1094, %v1067, %v796
      %v1102 = vsel %vm1094, %v1069, %v798
      %v1104 = vsel %vm1094, %v1071, %v800
      %v1106 = vsel %vm1094, %v1073, %v802
      %v1108 = vsel %vm1094, %v1075, %v804
      %v1110 = vsel %vm1094, %v1077, %v806
      %v1112 = vsel %vm1094, %v1079, %v808
      %v1114 = vsel %vm1094, %v1081, %v810
      %v1116 = vsel %vm1094, %v1083, %v812
      %v1118 = vsel %vm1094, %v1085, %v814
      %v1120 = vsel %vm1094, %v1087, %v816
      %v1122 = vsel %vm1094, %v1089, %v818
      %v1124 = vsel %vm1094, %v1091, %v820
      %v1126 = vsel %vm1094, %v1093, %v822
      %vm1127 = vcmask 97280
      %v1129 = vsel %vm1127, %v1096, %v829
      %v1131 = vsel %vm1127, %v1098, %v831
      %v1133 = vsel %vm1127, %v1100, %v833
      %v1135 = vsel %vm1127, %v1102, %v835
      %v1137 = vsel %vm1127, %v1104, %v837
      %v1139 = vsel %vm1127, %v1106, %v839
      %v1141 = vsel %vm1127, %v1108, %v841
      %v1143 = vsel %vm1127, %v1110, %v843
      %v1145 = vsel %vm1127, %v1112, %v845
      %v1147 = vsel %vm1127, %v1114, %v847
      %v1149 = vsel %vm1127, %v1116, %v849
      %v1151 = vsel %vm1127, %v1118, %v851
      %v1153 = vsel %vm1127, %v1120, %v853
      %v1155 = vsel %vm1127, %v1122, %v855
      %v1157 = vsel %vm1127, %v1124, %v857
      %v1159 = vsel %vm1127, %v1126, %v859
      %vm1160 = vcmask 130048
      %v1162 = vsel %vm1160, %v1129, %v876
      %v1164 = vsel %vm1160, %v1131, %v878
      %v1166 = vsel %vm1160, %v1133, %v880
      %v1168 = vsel %vm1160, %v1135, %v882
      %v1170 = vsel %vm1160, %v1137, %v884
      %v1172 = vsel %vm1160, %v1139, %v886
      %v1174 = vsel %vm1160, %v1141, %v888
      %v1176 = vsel %vm1160, %v1143, %v890
      %v1178 = vsel %vm1160, %v1145, %v892
      %v1180 = vsel %vm1160, %v1147, %v894
      %v1182 = vsel %vm1160, %v1149, %v896
      %v1184 = vsel %vm1160, %v1151, %v898
      %v1186 = vsel %vm1160, %v1153, %v900
      %v1188 = vsel %vm1160, %v1155, %v902
      %v1190 = vsel %vm1160, %v1157, %v904
      %v1192 = vsel %vm1160, %v1159, %v906
      %vm1193 = vcmask 162816
      %v1195 = vsel %vm1193, %v1162, %v911
      %v1197 = vsel %vm1193, %v1164, %v913
      %v1199 = vsel %vm1193, %v1166, %v915
      %v1201 = vsel %vm1193, %v1168, %v917
      %v1203 = vsel %vm1193, %v1170, %v919
      %v1205 = vsel %vm1193, %v1172, %v921
      %v1207 = vsel %vm1193, %v1174, %v923
      %v1209 = vsel %vm1193, %v1176, %v925
      %v1211 = vsel %vm1193, %v1178, %v927
      %v1213 = vsel %vm1193, %v1180, %v929
      %v1215 = vsel %vm1193, %v1182, %v931
      %v1217 = vsel %vm1193, %v1184, %v933
      %v1219 = vsel %vm1193, %v1186, %v935
      %v1221 = vsel %vm1193, %v1188, %v937
      %v1223 = vsel %vm1193, %v1190, %v939
      %v1225 = vsel %vm1193, %v1192, %v941
      %vm1226 = vcmask 195584
      %v1228 = vsel %vm1226, %v1195, %v948
      %v1230 = vsel %vm1226, %v1197, %v950
      %v1232 = vsel %vm1226, %v1199, %v952
      %v1234 = vsel %vm1226, %v1201, %v954
      %v1236 = vsel %vm1226, %v1203, %v956
      %v1238 = vsel %vm1226, %v1205, %v958
      %v1240 = vsel %vm1226, %v1207, %v960
      %v1242 = vsel %vm1226, %v1209, %v962
      %v1244 = vsel %vm1226, %v1211, %v964
      %v1246 = vsel %vm1226, %v1213, %v966
      %v1248 = vsel %vm1226, %v1215, %v968
      %v1250 = vsel %vm1226, %v1217, %v970
      %v1252 = vsel %vm1226, %v1219, %v972
      %v1254 = vsel %vm1226, %v1221, %v974
      %v1256 = vsel %vm1226, %v1223, %v976
      %v1258 = vsel %vm1226, %v1225, %v978
      %vm1259 = vcmask 228352
      %v1261 = vsel %vm1259, %v1228, %v995
      %v1263 = vsel %vm1259, %v1230, %v997
      %v1265 = vsel %vm1259, %v1232, %v999
      %v1267 = vsel %vm1259, %v1234, %v1001
      %v1269 = vsel %vm1259, %v1236, %v1003
      %v1271 = vsel %vm1259, %v1238, %v1005
      %v1273 = vsel %vm1259, %v1240, %v1007
      %v1275 = vsel %vm1259, %v1242, %v1009
      %v1277 = vsel %vm1259, %v1244, %v1011
      %v1279 = vsel %vm1259, %v1246, %v1013
      %v1281 = vsel %vm1259, %v1248, %v1015
      %v1283 = vsel %vm1259, %v1250, %v1017
      %v1285 = vsel %vm1259, %v1252, %v1019
      %v1287 = vsel %vm1259, %v1254, %v1021
      %v1289 = vsel %vm1259, %v1256, %v1023
      %v1291 = vsel %vm1259, %v1258, %v1025
      %vm1292 = vcmask 261120
      %v1294 = vsel %vm1292, %v1261, %v1030
      %v1296 = vsel %vm1292, %v1263, %v1032
      %v1298 = vsel %vm1292, %v1265, %v1034
      %v1300 = vsel %vm1292, %v1267, %v1036
      %v1302 = vsel %vm1292, %v1269, %v1038
      %v1304 = vsel %vm1292, %v1271, %v1040
      %v1306 = vsel %vm1292, %v1273, %v1042
      %v1308 = vsel %vm1292, %v1275, %v1044
      %v1310 = vsel %vm1292, %v1277, %v1046
      %v1312 = vsel %vm1292, %v1279, %v1048
      %v1314 = vsel %vm1292, %v1281, %v1050
      %v1316 = vsel %vm1292, %v1283, %v1052
      %v1318 = vsel %vm1292, %v1285, %v1054
      %v1320 = vsel %vm1292, %v1287, %v1056
      %v1322 = vsel %vm1292, %v1289, %v1058
      %v1324 = vsel %vm1292, %v1291, %v1060
      %v1325 = vld [vmem:[%s284] sm:$0xf]
      %v1326 = vld [vmem:[%s284 + $0x4] sm:$0xf]
      %v1327 = vld [vmem:[%s284 + $0x8] sm:$0xf]
      %v1328 = vld [vmem:[%s284 + $0xc] sm:$0xf]
      %v1329 = vld [vmem:[%s284 + $0x10] sm:$0xf]
      %v1330 = vld [vmem:[%s284 + $0x14] sm:$0xf]
      %v1331 = vld [vmem:[%s284 + $0x18] sm:$0xf]
      %v1332 = vld [vmem:[%s284 + $0x1c] sm:$0xf]
      %v1333 = vld [vmem:[%s284 + $0x20] sm:$0xf]
      %v1334 = vld [vmem:[%s284 + $0x24] sm:$0xf]
      %v1335 = vld [vmem:[%s284 + $0x28] sm:$0xf]
      %v1336 = vld [vmem:[%s284 + $0x2c] sm:$0xf]
      %v1337 = vld [vmem:[%s284 + $0x30] sm:$0xf]
      %v1338 = vld [vmem:[%s284 + $0x34] sm:$0xf]
      %v1339 = vld [vmem:[%s284 + $0x38] sm:$0xf]
      %v1340 = vld [vmem:[%s284 + $0x3c] sm:$0xf]
      %v1357 = vunpack.c.l.b16 %v1325
      %v1358 = vunpack.c.l.b16 %v1326
      %v1359 = vunpack.c.l.b16 %v1327
      %v1360 = vunpack.c.l.b16 %v1328
      %v1361 = vunpack.c.l.b16 %v1329
      %v1362 = vunpack.c.l.b16 %v1330
      %v1363 = vunpack.c.l.b16 %v1331
      %v1364 = vunpack.c.l.b16 %v1332
      %v1365 = vunpack.c.l.b16 %v1333
      %v1366 = vunpack.c.l.b16 %v1334
      %v1367 = vunpack.c.l.b16 %v1335
      %v1368 = vunpack.c.l.b16 %v1336
      %v1369 = vunpack.c.l.b16 %v1337
      %v1370 = vunpack.c.l.b16 %v1338
      %v1371 = vunpack.c.l.b16 %v1339
      %v1372 = vunpack.c.l.b16 %v1340
      %v1373 = vpack.c.b16 %v1358, %v1357
      %v1374 = vpack.c.b16 %v1360, %v1359
      %v1375 = vpack.c.b16 %v1362, %v1361
      %v1376 = vpack.c.b16 %v1364, %v1363
      %v1377 = vpack.c.b16 %v1366, %v1365
      %v1378 = vpack.c.b16 %v1368, %v1367
      %v1379 = vpack.c.b16 %v1370, %v1369
      %v1380 = vpack.c.b16 %v1372, %v1371
      %vm1381 = vcmask 293888
      %v1383 = vsel %vm1381, %v1373, 0
      %v1386 = vsel %vm1381, %v1374, 0
      %v1389 = vsel %vm1381, %v1375, 0
      %v1392 = vsel %vm1381, %v1376, 0
      %v1395 = vsel %vm1381, %v1377, 0
      %v1398 = vsel %vm1381, %v1378, 0
      %v1401 = vsel %vm1381, %v1379, 0
      %v1404 = vsel %vm1381, %v1380, 0
      %v1406 = vsel %vm1381, %v1294, 0
      %v1408 = vsel %vm1381, %v1296, 0
      %v1410 = vsel %vm1381, %v1298, 0
      %v1412 = vsel %vm1381, %v1300, 0
      %v1414 = vsel %vm1381, %v1302, 0
      %v1416 = vsel %vm1381, %v1304, 0
      %v1418 = vsel %vm1381, %v1306, 0
      %v1420 = vsel %vm1381, %v1308, 0
      %v1422 = vsel %vm1381, %v1310, 0
      %v1424 = vsel %vm1381, %v1312, 0
      %v1426 = vsel %vm1381, %v1314, 0
      %v1428 = vsel %vm1381, %v1316, 0
      %v1430 = vsel %vm1381, %v1318, 0
      %v1432 = vsel %vm1381, %v1320, 0
      %v1434 = vsel %vm1381, %v1322, 0
      %v1436 = vsel %vm1381, %v1324, 0
      %1438 = vmatprep.subr.bf16.mxu0 0
      %1439 = vmatpush1.bf16.xpose.msra.mxu0 %v1420
      %1440 = vmatprep.subr.bf16.mxu0 0
      %1441 = vmatpush1.bf16.xpose.msra.mxu0 %v1418
      %1442 = vmatprep.subr.bf16.mxu0 0
      %1443 = vmatpush1.bf16.xpose.msra.mxu0 %v1416
      %1444 = vmatprep.subr.bf16.mxu0 0
      %1445 = vmatpush1.bf16.xpose.msra.mxu0 %v1414
      %1446 = vmatprep.subr.bf16.mxu0 0
      %1447 = vmatpush1.bf16.xpose.msra.mxu0 %v1412
      %1448 = vmatprep.subr.bf16.mxu0 0
      %1449 = vmatpush1.bf16.xpose.msra.mxu0 %v1410
      %1450 = vmatprep.subr.bf16.mxu0 0
      %1451 = vmatpush1.bf16.xpose.msra.mxu0 %v1408
      %1452 = vmatprep.subr.bf16.mxu0 0
      %1453 = vmatpush1.bf16.xpose.msra.mxu0 %v1406
      %1454 = vmatprep.subr.bf16.mxu0 0
      %1455 = vmatpush2.bf16.xpose.msra.mxu0 %v1436
      %1456 = vmatprep.subr.bf16.mxu0 0
      %1457 = vmatpush2.bf16.xpose.msra.mxu0 %v1434
      %1458 = vmatprep.subr.bf16.mxu0 0
      %1459 = vmatpush2.bf16.xpose.msra.mxu0 %v1432
      %1460 = vmatprep.subr.bf16.mxu0 0
      %1461 = vmatpush2.bf16.xpose.msra.mxu0 %v1430
      %1462 = vmatprep.subr.bf16.mxu0 0
      %1463 = vmatpush2.bf16.xpose.msra.mxu0 %v1428
      %1464 = vmatprep.subr.bf16.mxu0 0
      %1465 = vmatpush2.bf16.xpose.msra.mxu0 %v1426
      %1466 = vmatprep.subr.bf16.mxu0 0
      %1467 = vmatpush2.bf16.xpose.msra.mxu0 %v1424
      %1468 = vmatprep.subr.bf16.mxu0 0
      %1469 = vmatpush2.bf16.xpose.msra.mxu0 %v1422
      %1470 = vmatprep.mubr.bf16.mxu0 0
      %1471 = vmatmul.mubr.bf16.gmra.mxu0 %v1383
      %v1472 = vpop.f32.mrf.mxu0
      %v1473 = vadd.f32 0.0, %v1472
      %v1474 = vpop.f32.mrf.mxu0
      %v1475 = vadd.f32 0.0, %v1474
      %v1476 = vpop.f32.mrf.mxu0
      %v1477 = vadd.f32 0.0, %v1476
      %v1478 = vpop.f32.mrf.mxu0
      %v1479 = vadd.f32 0.0, %v1478
      %1480 = vmatprep.mubr.bf16.mxu0 0
      %1481 = vmatmul.mubr.bf16.gmra.mxu0 %v1386
      %v1482 = vpop.f32.mrf.mxu0
      %v1483 = vadd.f32 0.0, %v1482
      %v1484 = vpop.f32.mrf.mxu0
      %v1485 = vadd.f32 0.0, %v1484
      %v1486 = vpop.f32.mrf.mxu0
      %v1487 = vadd.f32 0.0, %v1486
      %v1488 = vpop.f32.mrf.mxu0
      %v1489 = vadd.f32 0.0, %v1488
      %1490 = vmatprep.mubr.bf16.mxu0 0
      %1491 = vmatmul.mubr.bf16.gmra.mxu0 %v1389
      %v1492 = vpop.f32.mrf.mxu0
      %v1493 = vadd.f32 0.0, %v1492
      %v1494 = vpop.f32.mrf.mxu0
      %v1495 = vadd.f32 0.0, %v1494
      %v1496 = vpop.f32.mrf.mxu0
      %v1497 = vadd.f32 0.0, %v1496
      %v1498 = vpop.f32.mrf.mxu0
      %v1499 = vadd.f32 0.0, %v1498
      %1500 = vmatprep.mubr.bf16.mxu0 0
      %1501 = vmatmul.mubr.bf16.gmra.mxu0 %v1392
      %v1502 = vpop.f32.mrf.mxu0
      %v1503 = vadd.f32 0.0, %v1502
      %v1504 = vpop.f32.mrf.mxu0
      %v1505 = vadd.f32 0.0, %v1504
      %v1506 = vpop.f32.mrf.mxu0
      %v1507 = vadd.f32 0.0, %v1506
      %v1508 = vpop.f32.mrf.mxu0
      %v1509 = vadd.f32 0.0, %v1508
      %1510 = vmatprep.mubr.bf16.mxu0 0
      %1511 = vmatmul.mubr.bf16.gmra.mxu0 %v1395
      %v1512 = vpop.f32.mrf.mxu0
      %v1513 = vadd.f32 0.0, %v1512
      %v1514 = vpop.f32.mrf.mxu0
      %v1515 = vadd.f32 0.0, %v1514
      %v1516 = vpop.f32.mrf.mxu0
      %v1517 = vadd.f32 0.0, %v1516
      %v1518 = vpop.f32.mrf.mxu0
      %v1519 = vadd.f32 0.0, %v1518
      %1520 = vmatprep.mubr.bf16.mxu0 0
      %1521 = vmatmul.mubr.bf16.gmra.mxu0 %v1398
      %v1522 = vpop.f32.mrf.mxu0
      %v1523 = vadd.f32 0.0, %v1522
      %v1524 = vpop.f32.mrf.mxu0
      %v1525 = vadd.f32 0.0, %v1524
      %v1526 = vpop.f32.mrf.mxu0
      %v1527 = vadd.f32 0.0, %v1526
      %v1528 = vpop.f32.mrf.mxu0
      %v1529 = vadd.f32 0.0, %v1528
      %1530 = vmatprep.mubr.bf16.mxu0 0
      %1531 = vmatmul.mubr.bf16.gmra.mxu0 %v1401
      %v1532 = vpop.f32.mrf.mxu0
      %v1533 = vadd.f32 0.0, %v1532
      %v1534 = vpop.f32.mrf.mxu0
      %v1535 = vadd.f32 0.0, %v1534
      %v1536 = vpop.f32.mrf.mxu0
      %v1537 = vadd.f32 0.0, %v1536
      %v1538 = vpop.f32.mrf.mxu0
      %v1539 = vadd.f32 0.0, %v1538
      %1540 = vmatprep.mubr.bf16.mxu0 0
      %1541 = vmatmul.mubr.bf16.gmra.mxu0 %v1404
      %v1542 = vpop.f32.mrf.mxu0
      %v1543 = vadd.f32 0.0, %v1542
      %v1544 = vpop.f32.mrf.mxu0
      %v1545 = vadd.f32 0.0, %v1544
      %v1546 = vpop.f32.mrf.mxu0
      %v1547 = vadd.f32 0.0, %v1546
      %v1548 = vpop.f32.mrf.mxu0
      %v1549 = vadd.f32 0.0, %v1548
      %1550 = vdwg.mxu0
      %v1551 = vadd.f32 %v1473, %v1475
      %1552 = vadd.xlane.f32.xlu0 %v1551
      %v1553 = vpop.xlane.xlu0 %1552
      %v1554 = vadd.f32 %v1477, %v1479
      %1555 = vadd.xlane.f32.xlu0 %v1554
      %v1556 = vpop.xlane.xlu0 %1555
      %v1557 = vadd.f32 %v1483, %v1485
      %1558 = vadd.xlane.f32.xlu0 %v1557
      %v1559 = vpop.xlane.xlu0 %1558
      %v1560 = vadd.f32 %v1487, %v1489
      %1561 = vadd.xlane.f32.xlu0 %v1560
      %v1562 = vpop.xlane.xlu0 %1561
      %v1563 = vadd.f32 %v1493, %v1495
      %1564 = vadd.xlane.f32.xlu0 %v1563
      %v1565 = vpop.xlane.xlu0 %1564
      %v1566 = vadd.f32 %v1497, %v1499
      %1567 = vadd.xlane.f32.xlu0 %v1566
      %v1568 = vpop.xlane.xlu0 %1567
      %v1569 = vadd.f32 %v1503, %v1505
      %1570 = vadd.xlane.f32.xlu0 %v1569
      %v1571 = vpop.xlane.xlu0 %1570
      %v1572 = vadd.f32 %v1507, %v1509
      %1573 = vadd.xlane.f32.xlu0 %v1572
      %v1574 = vpop.xlane.xlu0 %1573
      %v1575 = vadd.f32 %v1513, %v1515
      %1576 = vadd.xlane.f32.xlu0 %v1575
      %v1577 = vpop.xlane.xlu0 %1576
      %v1578 = vadd.f32 %v1517, %v1519
      %1579 = vadd.xlane.f32.xlu0 %v1578
      %v1580 = vpop.xlane.xlu0 %1579
      %v1581 = vadd.f32 %v1523, %v1525
      %1582 = vadd.xlane.f32.xlu0 %v1581
      %v1583 = vpop.xlane.xlu0 %1582
      %v1584 = vadd.f32 %v1527, %v1529
      %1585 = vadd.xlane.f32.xlu0 %v1584
      %v1586 = vpop.xlane.xlu0 %1585
      %v1587 = vadd.f32 %v1533, %v1535
      %1588 = vadd.xlane.f32.xlu0 %v1587
      %v1589 = vpop.xlane.xlu0 %1588
      %v1590 = vadd.f32 %v1537, %v1539
      %1591 = vadd.xlane.f32.xlu0 %v1590
      %v1592 = vpop.xlane.xlu0 %1591
      %v1593 = vadd.f32 %v1543, %v1545
      %1594 = vadd.xlane.f32.xlu0 %v1593
      %v1595 = vpop.xlane.xlu0 %1594
      %v1596 = vadd.f32 %v1547, %v1549
      %1597 = vadd.xlane.f32.xlu0 %v1596
      %v1598 = vpop.xlane.xlu0 %1597
      %vm1599 = vcmask 7168
      %1600 = vst.msk [vmem:[%s314] sm:$0xff] %vm1599, %v1553
      %1601 = vst.msk [vmem:[%s314 + $0x8] sm:$0xff] %vm1599, %v1556
      %1602 = vst.msk [vmem:[%s314 + $0x10] sm:$0xff] %vm1599, %v1559
      %1603 = vst.msk [vmem:[%s314 + $0x18] sm:$0xff] %vm1599, %v1562
      %1604 = vst.msk [vmem:[%s314 + $0x20] sm:$0xff] %vm1599, %v1565
      %1605 = vst.msk [vmem:[%s314 + $0x28] sm:$0xff] %vm1599, %v1568
      %1606 = vst.msk [vmem:[%s314 + $0x30] sm:$0xff] %vm1599, %v1571
      %1607 = vst.msk [vmem:[%s314 + $0x38] sm:$0xff] %vm1599, %v1574
      %1608 = vst.msk [vmem:[%s314 + $0x40] sm:$0xff] %vm1599, %v1577
      %1609 = vst.msk [vmem:[%s314 + $0x48] sm:$0xff] %vm1599, %v1580
      %1610 = vst.msk [vmem:[%s314 + $0x50] sm:$0xff] %vm1599, %v1583
      %1611 = vst.msk [vmem:[%s314 + $0x58] sm:$0xff] %vm1599, %v1586
      %1612 = vst.msk [vmem:[%s314 + $0x60] sm:$0xff] %vm1599, %v1589
      %1613 = vst.msk [vmem:[%s314 + $0x68] sm:$0xff] %vm1599, %v1592
      %1614 = vst.msk [vmem:[%s314 + $0x70] sm:$0xff] %vm1599, %v1595
      %1615 = vst.msk [vmem:[%s314 + $0x78] sm:$0xff] %vm1599, %v1598
      %v1616 = vmul.f32 %v1473, %v1473
      %v1617 = vmul.f32 %v1475, %v1475
      %v1618 = vmul.f32 %v1477, %v1477
      %v1619 = vmul.f32 %v1479, %v1479
      %v1620 = vmul.f32 %v1483, %v1483
      %v1621 = vmul.f32 %v1485, %v1485
      %v1622 = vmul.f32 %v1487, %v1487
      %v1623 = vmul.f32 %v1489, %v1489
      %v1624 = vmul.f32 %v1493, %v1493
      %v1625 = vmul.f32 %v1495, %v1495
      %v1626 = vmul.f32 %v1497, %v1497
      %v1627 = vmul.f32 %v1499, %v1499
      %v1628 = vmul.f32 %v1503, %v1503
      %v1629 = vmul.f32 %v1505, %v1505
      %v1630 = vmul.f32 %v1507, %v1507
      %v1631 = vmul.f32 %v1509, %v1509
      %v1632 = vmul.f32 %v1513, %v1513
      %v1633 = vmul.f32 %v1515, %v1515
      %v1634 = vmul.f32 %v1517, %v1517
      %v1635 = vmul.f32 %v1519, %v1519
      %v1636 = vmul.f32 %v1523, %v1523
      %v1637 = vmul.f32 %v1525, %v1525
      %v1638 = vmul.f32 %v1527, %v1527
      %v1639 = vmul.f32 %v1529, %v1529
      %v1640 = vmul.f32 %v1533, %v1533
      %v1641 = vmul.f32 %v1535, %v1535
      %v1642 = vmul.f32 %v1537, %v1537
      %v1643 = vmul.f32 %v1539, %v1539
      %v1644 = vmul.f32 %v1543, %v1543
      %v1645 = vmul.f32 %v1545, %v1545
      %v1646 = vmul.f32 %v1547, %v1547
      %v1647 = vmul.f32 %v1549, %v1549
      %v1648 = vadd.f32 %v1616, %v1617
      %1649 = vadd.xlane.f32.xlu0 %v1648
      %v1650 = vpop.xlane.xlu0 %1649
      %v1651 = vadd.f32 %v1618, %v1619
      %1652 = vadd.xlane.f32.xlu0 %v1651
      %v1653 = vpop.xlane.xlu0 %1652
      %v1654 = vadd.f32 %v1620, %v1621
      %1655 = vadd.xlane.f32.xlu0 %v1654
      %v1656 = vpop.xlane.xlu0 %1655
      %v1657 = vadd.f32 %v1622, %v1623
      %1658 = vadd.xlane.f32.xlu0 %v1657
      %v1659 = vpop.xlane.xlu0 %1658
      %v1660 = vadd.f32 %v1624, %v1625
      %1661 = vadd.xlane.f32.xlu0 %v1660
      %v1662 = vpop.xlane.xlu0 %1661
      %v1663 = vadd.f32 %v1626, %v1627
      %1664 = vadd.xlane.f32.xlu0 %v1663
      %v1665 = vpop.xlane.xlu0 %1664
      %v1666 = vadd.f32 %v1628, %v1629
      %1667 = vadd.xlane.f32.xlu0 %v1666
      %v1668 = vpop.xlane.xlu0 %1667
      %v1669 = vadd.f32 %v1630, %v1631
      %1670 = vadd.xlane.f32.xlu0 %v1669
      %v1671 = vpop.xlane.xlu0 %1670
      %v1672 = vadd.f32 %v1632, %v1633
      %1673 = vadd.xlane.f32.xlu0 %v1672
      %v1674 = vpop.xlane.xlu0 %1673
      %v1675 = vadd.f32 %v1634, %v1635
      %1676 = vadd.xlane.f32.xlu0 %v1675
      %v1677 = vpop.xlane.xlu0 %1676
      %v1678 = vadd.f32 %v1636, %v1637
      %1679 = vadd.xlane.f32.xlu0 %v1678
      %v1680 = vpop.xlane.xlu0 %1679
      %v1681 = vadd.f32 %v1638, %v1639
      %1682 = vadd.xlane.f32.xlu0 %v1681
      %v1683 = vpop.xlane.xlu0 %1682
      %v1684 = vadd.f32 %v1640, %v1641
      %1685 = vadd.xlane.f32.xlu0 %v1684
      %v1686 = vpop.xlane.xlu0 %1685
      %v1687 = vadd.f32 %v1642, %v1643
      %1688 = vadd.xlane.f32.xlu0 %v1687
      %v1689 = vpop.xlane.xlu0 %1688
      %v1690 = vadd.f32 %v1644, %v1645
      %1691 = vadd.xlane.f32.xlu0 %v1690
      %v1692 = vpop.xlane.xlu0 %1691
      %v1693 = vadd.f32 %v1646, %v1647
      %1694 = vadd.xlane.f32.xlu0 %v1693
      %v1695 = vpop.xlane.xlu0 %1694
      %1696 = vst.msk [vmem:[%s328] sm:$0xff] %vm1599, %v1650
      %1697 = vst.msk [vmem:[%s328 + $0x8] sm:$0xff] %vm1599, %v1653
      %1698 = vst.msk [vmem:[%s328 + $0x10] sm:$0xff] %vm1599, %v1656
      %1699 = vst.msk [vmem:[%s328 + $0x18] sm:$0xff] %vm1599, %v1659
      %1700 = vst.msk [vmem:[%s328 + $0x20] sm:$0xff] %vm1599, %v1662
      %1701 = vst.msk [vmem:[%s328 + $0x28] sm:$0xff] %vm1599, %v1665
      %1702 = vst.msk [vmem:[%s328 + $0x30] sm:$0xff] %vm1599, %v1668
      %1703 = vst.msk [vmem:[%s328 + $0x38] sm:$0xff] %vm1599, %v1671
      %1704 = vst.msk [vmem:[%s328 + $0x40] sm:$0xff] %vm1599, %v1674
      %1705 = vst.msk [vmem:[%s328 + $0x48] sm:$0xff] %vm1599, %v1677
      %1706 = vst.msk [vmem:[%s328 + $0x50] sm:$0xff] %vm1599, %v1680
      %1707 = vst.msk [vmem:[%s328 + $0x58] sm:$0xff] %vm1599, %v1683
      %1708 = vst.msk [vmem:[%s328 + $0x60] sm:$0xff] %vm1599, %v1686
      %1709 = vst.msk [vmem:[%s328 + $0x68] sm:$0xff] %vm1599, %v1689
      %1710 = vst.msk [vmem:[%s328 + $0x70] sm:$0xff] %vm1599, %v1692
      %1711 = vst.msk [vmem:[%s328 + $0x78] sm:$0xff] %vm1599, %v1695
      %v1712 = vpack.c.bf16 %v1477, %v1473
      %v1713 = vpack.c.bf16 %v1479, %v1475
      %v1714 = vpack.c.bf16 %v1487, %v1483
      %v1715 = vpack.c.bf16 %v1489, %v1485
      %v1716 = vpack.c.bf16 %v1497, %v1493
      %v1717 = vpack.c.bf16 %v1499, %v1495
      %v1718 = vpack.c.bf16 %v1507, %v1503
      %v1719 = vpack.c.bf16 %v1509, %v1505
      %v1720 = vpack.c.bf16 %v1517, %v1513
      %v1721 = vpack.c.bf16 %v1519, %v1515
      %v1722 = vpack.c.bf16 %v1527, %v1523
      %v1723 = vpack.c.bf16 %v1529, %v1525
      %v1724 = vpack.c.bf16 %v1537, %v1533
      %v1725 = vpack.c.bf16 %v1539, %v1535
      %v1726 = vpack.c.bf16 %v1547, %v1543
      %v1727 = vpack.c.bf16 %v1549, %v1545
      %v1744 = vunpack.c.l.b16 %v1712
      %v1745 = vunpack.c.l.b16 %v1713
      %v1746 = vunpack.c.h.b16 %v1712
      %v1747 = vunpack.c.h.b16 %v1713
      %v1748 = vunpack.c.l.b16 %v1714
      %v1749 = vunpack.c.l.b16 %v1715
      %v1750 = vunpack.c.h.b16 %v1714
      %v1751 = vunpack.c.h.b16 %v1715
      %v1752 = vunpack.c.l.b16 %v1716
      %v1753 = vunpack.c.l.b16 %v1717
      %v1754 = vunpack.c.h.b16 %v1716
      %v1755 = vunpack.c.h.b16 %v1717
      %v1756 = vunpack.c.l.b16 %v1718
      %v1757 = vunpack.c.l.b16 %v1719
      %v1758 = vunpack.c.h.b16 %v1718
      %v1759 = vunpack.c.h.b16 %v1719
      %v1760 = vunpack.c.l.b16 %v1720
      %v1761 = vunpack.c.l.b16 %v1721
      %v1762 = vunpack.c.h.b16 %v1720
      %v1763 = vunpack.c.h.b16 %v1721
      %v1764 = vunpack.c.l.b16 %v1722
      %v1765 = vunpack.c.l.b16 %v1723
      %v1766 = vunpack.c.h.b16 %v1722
      %v1767 = vunpack.c.h.b16 %v1723
      %v1768 = vunpack.c.l.b16 %v1724
      %v1769 = vunpack.c.l.b16 %v1725
      %v1770 = vunpack.c.h.b16 %v1724
      %v1771 = vunpack.c.h.b16 %v1725
      %v1772 = vunpack.c.l.b16 %v1726
      %v1773 = vunpack.c.l.b16 %v1727
      %v1774 = vunpack.c.h.b16 %v1726
      %v1775 = vunpack.c.h.b16 %v1727
      %v1776 = vpack.c.b16 %v1745, %v1744
      %v1777 = vpack.c.b16 %v1747, %v1746
      %v1778 = vpack.c.b16 %v1749, %v1748
      %v1779 = vpack.c.b16 %v1751, %v1750
      %v1780 = vpack.c.b16 %v1753, %v1752
      %v1781 = vpack.c.b16 %v1755, %v1754
      %v1782 = vpack.c.b16 %v1757, %v1756
      %v1783 = vpack.c.b16 %v1759, %v1758
      %v1784 = vpack.c.b16 %v1761, %v1760
      %v1785 = vpack.c.b16 %v1763, %v1762
      %v1786 = vpack.c.b16 %v1765, %v1764
      %v1787 = vpack.c.b16 %v1767, %v1766
      %v1788 = vpack.c.b16 %v1769, %v1768
      %v1789 = vpack.c.b16 %v1771, %v1770
      %v1790 = vpack.c.b16 %v1773, %v1772
      %v1791 = vpack.c.b16 %v1775, %v1774
      %1808 = vst [vmem:[%s299] sm:$0xff] %v1776
      %1809 = vst [vmem:[%s299 + $0x8] sm:$0xff] %v1777
      %1810 = vst [vmem:[%s299 + $0x10] sm:$0xff] %v1778
      %1811 = vst [vmem:[%s299 + $0x18] sm:$0xff] %v1779
      %1812 = vst [vmem:[%s299 + $0x20] sm:$0xff] %v1780
      %1813 = vst [vmem:[%s299 + $0x28] sm:$0xff] %v1781
      %1814 = vst [vmem:[%s299 + $0x30] sm:$0xff] %v1782
      %1815 = vst [vmem:[%s299 + $0x38] sm:$0xff] %v1783
      %1816 = vst [vmem:[%s299 + $0x40] sm:$0xff] %v1784
      %1817 = vst [vmem:[%s299 + $0x48] sm:$0xff] %v1785
      %1818 = vst [vmem:[%s299 + $0x50] sm:$0xff] %v1786
      %1819 = vst [vmem:[%s299 + $0x58] sm:$0xff] %v1787
      %1820 = vst [vmem:[%s299 + $0x60] sm:$0xff] %v1788
      %1821 = vst [vmem:[%s299 + $0x68] sm:$0xff] %v1789
      %1822 = vst [vmem:[%s299 + $0x70] sm:$0xff] %v1790
      %1823 = vst [vmem:[%s299 + $0x78] sm:$0xff] %v1791
      %s1824 = smul.u32 16, %s22
      %s1825 = smul.u32 2, %s23
      %p1826 = scmp.lt.s32.totalorder %s21, 1
      %s1827 = scalar_select %p1826, %s21, 1
      %p1828 = scmp.lt.s32.totalorder %s1824, 15
      %s1829 = scalar_select %p1828, %s1824, 15
      %p1830 = scmp.lt.s32.totalorder %s1825, 1
      %s1831 = scalar_select %p1830, %s1825, 1
      %s1832 = smul.addr %s1829, 2
      %s1833 = sadd.s32 %s1831, %s1832
      %s1834 = smul.addr %s1827, 32
      %s1835 = sadd.s32 %s1833, %s1834
      %s1836 = smul.addr %s1835, 4
      %s1837 = scalar_lea.vmem %s2, %s1836
      %s1838 = smul.u32 16, %s22
      %p1839 = scmp.lt.s32.totalorder %s21, 1
      %s1840 = scalar_select %p1839, %s21, 1
      %p1841 = scmp.lt.s32.totalorder %s23, 0
      %s1842 = scalar_select %p1841, %s23, 0
      %p1843 = scmp.lt.s32.totalorder %s1838, 15
      %s1844 = scalar_select %p1843, %s1838, 15
      %s1845 = smul.addr %s1842, 16
      %s1846 = sadd.s32 %s1844, %s1845
      %s1847 = smul.addr %s1840, 16
      %s1848 = sadd.s32 %s1846, %s1847
      %s1849 = smul.addr %s1848, 8
      %s1850 = scalar_lea.vmem %s3, %s1849
      %s1851 = smul.u32 16, %s22
      %p1852 = scmp.lt.s32.totalorder %s21, 1
      %s1853 = scalar_select %p1852, %s21, 1
      %p1854 = scmp.lt.s32.totalorder %s23, 0
      %s1855 = scalar_select %p1854, %s23, 0
      %p1856 = scmp.lt.s32.totalorder %s1851, 15
      %s1857 = scalar_select %p1856, %s1851, 15
      %s1858 = smul.addr %s1855, 16
      %s1859 = sadd.s32 %s1857, %s1858
      %s1860 = smul.addr %s1853, 16
      %s1861 = sadd.s32 %s1859, %s1860
      %s1862 = smul.addr %s1861, 8
      %s1863 = scalar_lea.vmem %s4, %s1862
      // Predicated region
      $region29: #{cnn_block.2} parent=27 // pred_check
        %p1864 = pneg %p109
      $region30: #{cnn_block.2} parent=27 // pred_check_branch
        %1866 = sbr.rel (%p1864) target = $region32
      $region31: #{cnn_block.2} parent=27 // pred_region
        %s1867 = smul.u32 16, %s22
        %s1868 = smul.u32 2, %s23
      $region32: #{cnn_block.2} parent=27 // pred_fallthru
        _
      // Predicated region
      $region33: #{cnn_block.2} parent=27 // pred_check
        %p1869 = pneg %p139
      $region34: #{cnn_block.2} parent=27 // pred_check_branch
        %1871 = sbr.rel (%p1869) target = $region36
      $region35: #{cnn_block.2} parent=27 // pred_region
        %s1872 = smul.u32 16, %s22
      $region36: #{cnn_block.2} parent=27 // pred_fallthru
        _
      // Predicated region
      $region37: #{cnn_block.2} parent=27 // pred_check
        %p1873 = pneg %p169
      $region38: #{cnn_block.2} parent=27 // pred_check_branch
        %1875 = sbr.rel (%p1873) target = $region40
      $region39: #{cnn_block.2} parent=27 // pred_region
        %s1876 = smul.u32 16, %s22
      $region40: #{cnn_block.2} parent=27 // pred_fallthru
        _
    $region28: #{cnn_block.2} parent=5 // pred_fallthru
      _
    %p1877 = scmp.le.s32.totalorder 2, %s11
    // Predicated region
    $region41: #{cnn_block.2} parent=5 // pred_check
      %p1878 = pneg %p1877
    $region42: #{cnn_block.2} parent=5 // pred_check_branch
      %1880 = sbr.rel (%p1878) target = $region44
    $region43: #{cnn_block.2} parent=5 // pred_region
      %s1881 = ssub.s32 %s11, 2
      // Predicated region
      $region45: #{cnn_block.2} parent=43 // pred_check
        %p1882 = pneg %p115
      $region46: #{cnn_block.2} parent=43 // pred_check_branch
        %1884 = sbr.rel (%p1882) target = $region48
      $region47: #{cnn_block.2} parent=43 // pred_region
        %s1885 = smul.u32 16, %s25
        %s1886 = smul.u32 2, %s26
        %p1887 = scmp.lt.s32.totalorder %s24, 1
        %s1888 = scalar_select %p1887, %s24, 1
        %p1889 = scmp.lt.s32.totalorder %s1885, 15
        %s1890 = scalar_select %p1889, %s1885, 15
        %p1891 = scmp.lt.s32.totalorder %s1886, 1
        %s1892 = scalar_select %p1891, %s1886, 1
        %s1893 = smul.addr %s1890, 2
        %s1894 = sadd.s32 %s1892, %s1893
        %s1895 = smul.addr %s1888, 32
        %s1896 = sadd.s32 %s1894, %s1895
        %s1897 = smul.addr %s1896, 4
        %s1898 = scalar_lea.vmem %s2, %s1897
      $region48: #{cnn_block.2} parent=43 // pred_fallthru
        _
      // Predicated region
      $region49: #{cnn_block.2} parent=43 // pred_check
        %p1899 = pneg %p145
      $region50: #{cnn_block.2} parent=43 // pred_check_branch
        %1901 = sbr.rel (%p1899) target = $region52
      $region51: #{cnn_block.2} parent=43 // pred_region
        %s1902 = smul.u32 16, %s25
        %p1903 = scmp.lt.s32.totalorder %s24, 1
        %s1904 = scalar_select %p1903, %s24, 1
        %p1905 = scmp.lt.s32.totalorder %s26, 0
        %s1906 = scalar_select %p1905, %s26, 0
        %p1907 = scmp.lt.s32.totalorder %s1902, 15
        %s1908 = scalar_select %p1907, %s1902, 15
        %s1909 = smul.addr %s1906, 16
        %s1910 = sadd.s32 %s1908, %s1909
        %s1911 = smul.addr %s1904, 16
        %s1912 = sadd.s32 %s1910, %s1911
        %s1913 = smul.addr %s1912, 8
        %s1914 = scalar_lea.vmem %s3, %s1913
      $region52: #{cnn_block.2} parent=43 // pred_fallthru
        _
      // Predicated region
      $region53: #{cnn_block.2} parent=43 // pred_check
        %p1915 = pneg %p175
      $region54: #{cnn_block.2} parent=43 // pred_check_branch
        %1917 = sbr.rel (%p1915) target = $region56
      $region55: #{cnn_block.2} parent=43 // pred_region
        %s1918 = smul.u32 16, %s25
        %p1919 = scmp.lt.s32.totalorder %s24, 1
        %s1920 = scalar_select %p1919, %s24, 1
        %p1921 = scmp.lt.s32.totalorder %s26, 0
        %s1922 = scalar_select %p1921, %s26, 0
        %p1923 = scmp.lt.s32.totalorder %s1918, 15
        %s1924 = scalar_select %p1923, %s1918, 15
        %s1925 = smul.addr %s1922, 16
        %s1926 = sadd.s32 %s1924, %s1925
        %s1927 = smul.addr %s1920, 16
        %s1928 = sadd.s32 %s1926, %s1927
        %s1929 = smul.addr %s1928, 8
        %s1930 = scalar_lea.vmem %s4, %s1929
      $region56: #{cnn_block.2} parent=43 // pred_fallthru
        _
    $region44: #{cnn_block.2} parent=5 // pred_fallthru
      _
  $region6: #{cnn_block.2} parent=0 // loop_footer
    %s15 = sadd.s32 1, %s11
  $region7: #{cnn_block.2} parent=0 // loop_footer_branch
    %10 = sbr.rel target = $region3
  $region8: #{cnn_block.2} parent=0 // loop_exit
    _

</llo_original>
